<compile_context>
chip_gen: v7x
topology: tpu7x:2x2x1
jax: 0.10.0
libtpu: 0.0.40
codegen_flags: <defaults>
</compile_context>

<pallas_src>
import jax
import jax.numpy as jnp
from jax.experimental import pallas as pl
from jax.experimental.pallas import tpu as pltpu


_CHUNK_PIXEL_CAP = 128  # keeps each G_k at (128, 512) f32 = 256 KiB


def _pick_chunk_rows(H, W):
    """Rows per inner chunk: must divide H; rows*W lane-aligned (%128 == 0) and small."""
    divisors = [d for d in range(1, H + 1) if H % d == 0]
    aligned = [d for d in divisors if (d * W) % 128 == 0]
    small = [d for d in aligned if d * W <= _CHUNK_PIXEL_CAP]
    if small:
        return max(small)
    if aligned:
        return min(aligned)
    # TODO(synk): for very wide images where no small lane-aligned row count divides H,
    # split chunks along W as well to bound the size of the scatter matrices G_k.
    return H  # whole image per chunk (block dims == full dims is always legal)


def _pick_chunks_per_step(H, rows_per_chunk, W, target_pixels):
    """Chunks per grid step: divides H // rows_per_chunk; ~target_pixels per step."""
    max_cs = H // rows_per_chunk
    cs = max(1, min(max_cs, target_pixels // max(1, rows_per_chunk * W)))
    while max_cs % cs:
        cs -= 1
    return cs


def _deconv_kernel(x_ref, g_ref, w_ref, b_ref, o_ref):
    # x_ref: (1, Cin, PS)     one batch element, one band of input rows, pixels on lanes
    # g_ref: (4, P, 4*P)      per-tap 0/1 scatter matrices (local pixel -> local out idx)
    # w_ref: (4, Cout, Cin)   per-tap transposed ConvTranspose2d weights
    # b_ref: (Cout, 1)        bias
    # o_ref: (1, Cout, 4*PS)  final NCHW output band, rows/cols already 2x-interleaved
    cout = w_ref.shape[1]
    P = g_ref.shape[1]
    L = g_ref.shape[2]
    n_chunks = x_ref.shape[2] // P
    bias = b_ref[...]  # (Cout, 1) broadcasts over lanes

    for j in range(n_chunks):  # static, unrolled chunk loop (lane-aligned offsets)
        x = x_ref[0, :, pl.ds(j * P, P)]                       # (Cin, P)
        acc = jnp.zeros((cout, L), dtype=jnp.float32)
        for k in range(4):                                     # 2x2 kernel taps
            y = jnp.dot(w_ref[k], x, preferred_element_type=jnp.float32)          # (Cout, P)
            acc = acc + jnp.dot(y, g_ref[k], preferred_element_type=jnp.float32)  # (Cout, L)
        o_ref[0, :, pl.ds(j * L, L)] = (acc + bias).astype(o_ref.dtype)


def deconv_block(x_nchw, weight, bias, *, target_step_pixels=2048):
    """ConvTranspose2d(in_c, out_c, kernel_size=2, stride=2, padding=0), NCHW in/out.

    x_nchw : (N, Cin, H, W) float32
    weight : (Cin, Cout, 2, 2)   (PyTorch ConvTranspose2d weight layout)
    bias   : (Cout,)
    returns: (N, Cout, 2H, 2W)
    """
    N, Cin, H, W = x_nchw.shape
    Cout = weight.shape[1]
    HW = H * W

    rows_per_chunk = _pick_chunk_rows(H, W)
    P = rows_per_chunk * W                      # pixels per inner chunk (lane axis)
    L = 4 * P                                   # output elements per chunk
    cs = _pick_chunks_per_step(H, rows_per_chunk, W, target_step_pixels)
    PS = cs * P                                 # pixels per grid step
    grid = (N, HW // PS)

    # Free reshape: NCHW stays NCHW, spatial axes flattened.
    x_flat = x_nchw.reshape(N, Cin, HW)

    # Per-tap scatter matrices: G[k, p, q] = 1 iff local input pixel p = h*W + w writes
    # local output q = (2h + kh)*(2W) + 2w + kw   (k = 2*kh + kw).
    pp = jnp.arange(P)
    qq = jnp.arange(L)
    g_taps = []
    for kh in range(2):
        for kw in range(2):
            tgt = (2 * (pp // W) + kh) * (2 * W) + 2 * (pp % W) + kw
            g_taps.append((qq[None, :] == tgt[:, None]).astype(jnp.float32))
    g_mat = jnp.stack(g_taps, axis=0)           # (4, P, 4P)

    # Per-tap transposed weights: w_taps[k][o, c] = weight[c, o, kh, kw].
    w_taps = jnp.stack(
        [jnp.transpose(weight[:, :, kh, kw]) for kh in range(2) for kw in range(2)],
        axis=0,
    ).astype(jnp.float32)                       # (4, Cout, Cin)
    b_col = bias.reshape(Cout, 1).astype(jnp.float32)

    y_flat = pl.pallas_call(
        _deconv_kernel,
        out_shape=jax.ShapeDtypeStruct((N, Cout, 4 * HW), jnp.float32),
        grid=grid,
        in_specs=[
            pl.BlockSpec((1, Cin, PS), lambda n, t: (n, 0, t)),
            # Constant-index operands: fetched once, stay resident in VMEM across steps.
            pl.BlockSpec((4, P, L), lambda n, t: (0, 0, 0)),
            pl.BlockSpec((4, Cout, Cin), lambda n, t: (0, 0, 0)),
            pl.BlockSpec((Cout, 1), lambda n, t: (0, 0)),
        ],
        out_specs=pl.BlockSpec((1, Cout, 4 * PS), lambda n, t: (n, 0, t)),
        compiler_params=pltpu.CompilerParams(
            dimension_semantics=("parallel", "parallel"),
            # Safe on every generation (<= v7x scoped default of 32 MiB); actual use here
            # is ~2-3 MiB (double-buffered x/out bands + the four G matrices).
            vmem_limit_bytes=32 * 1024 * 1024,
        ),
    )(x_flat, g_mat, w_taps, b_col)

    # Free reshape back to NCHW.
    return y_flat.reshape(N, Cout, 2 * H, 2 * W)


def _reference(x_nchw, weight, bias):
    N, Cin, H, W = x_nchw.shape
    Cout = weight.shape[1]
    y6 = jnp.einsum("nchw,cokl->nhwklo", x_nchw, weight)   # (N,H,W,kh,kw,Cout)
    y = jnp.transpose(y6, (0, 1, 3, 2, 4, 5)).reshape(N, 2 * H, 2 * W, Cout)
    y = jnp.transpose(y, (0, 3, 1, 2))
    return y + bias[None, :, None, None]


if __name__ == "__main__":
    N, in_c, out_c, H, W = 2, 4, 8, 16, 16

    key = jax.random.PRNGKey(0)
    kx, kwt, kb = jax.random.split(key, 3)

    x = jax.random.normal(kx, (N, in_c, H, W), dtype=jnp.float32)
    # ConvTranspose2d weight layout: (in_c, out_c, 2, 2)
    weight = jax.random.normal(kwt, (in_c, out_c, 2, 2), dtype=jnp.float32) * 0.1
    bias = jax.random.normal(kb, (out_c,), dtype=jnp.float32) * 0.1

    out = deconv_block(x, weight, bias)
    out = jax.block_until_ready(out)

    ref = _reference(x, weight, bias)
    assert out.shape == (N, out_c, 2 * H, 2 * W), out.shape
    assert jnp.allclose(out, ref, rtol=1e-5, atol=1e-5), "mismatch vs reference"

    print("KERNEL_OK")
</pallas_src>

<mosaic_0001>
module attributes {stable_mosaic.version = 11 : i64} {
  func.func @_deconv_kernel(%arg0: i32, %arg1: i32, %arg2: memref<1x4x256xf32, #tpu.memory_space<vmem>>, %arg3: memref<4x128x512xf32, #tpu.memory_space<vmem>>, %arg4: memref<4x8x4xf32, #tpu.memory_space<vmem>>, %arg5: memref<8x1xf32, #tpu.memory_space<vmem>>, %arg6: memref<1x8x1024xf32, #tpu.memory_space<vmem>>) attributes {dimension_semantics = [#tpu.dimension_semantics<parallel>, #tpu.dimension_semantics<parallel>], iteration_bounds = array<i64: 2, 1>, scalar_prefetch = 0 : i64, scratch_operands = 0 : i64, tpu.core_type = #tpu.core_type<tc>, window_params = [{transform_indices = @transform_0, window_bounds = array<i64: 1, 4, 256>}, {pipeline_mode = #tpu.pipeline_mode<synchronous>, transform_indices = @transform_1, window_bounds = array<i64: 4, 128, 512>}, {pipeline_mode = #tpu.pipeline_mode<synchronous>, transform_indices = @transform_2, window_bounds = array<i64: 4, 8, 4>}, {pipeline_mode = #tpu.pipeline_mode<synchronous>, transform_indices = @transform_3, window_bounds = array<i64: 8, 1>}, {transform_indices = @transform_4, window_bounds = array<i64: 1, 8, 1024>}]} {
    %c0 = arith.constant 0 : index
    %c0_0 = arith.constant 0 : index
    %0 = vector.load %arg5[%c0, %c0_0] : memref<8x1xf32, #tpu.memory_space<vmem>>, vector<8x1xf32>
    %c0_1 = arith.constant 0 : index
    %c0_2 = arith.constant 0 : index
    %c0_3 = arith.constant 0 : index
    %1 = vector.load %arg2[%c0_1, %c0_2, %c0_3] : memref<1x4x256xf32, #tpu.memory_space<vmem>>, vector<1x4x128xf32>
    %2 = vector.shape_cast %1 : vector<1x4x128xf32> to vector<4x128xf32>
    %cst = arith.constant 0.000000e+00 : f32
    %3 = vector.broadcast %cst : f32 to vector<8x512xf32>
    %c0_4 = arith.constant 0 : index
    %c0_5 = arith.constant 0 : index
    %c0_6 = arith.constant 0 : index
    %4 = vector.load %arg4[%c0_4, %c0_5, %c0_6] : memref<4x8x4xf32, #tpu.memory_space<vmem>>, vector<1x8x4xf32>
    %5 = vector.shape_cast %4 : vector<1x8x4xf32> to vector<8x4xf32>
    %cst_7 = arith.constant dense<0.000000e+00> : vector<8x128xf32>
    %6 = tpu.matmul %5, %2, %cst_7 {dimension_numbers = #tpu.dot_dimension_numbers<[1], [0], [0], [1], [0, 0, 1, 1], [], []>} : vector<8x4xf32>, vector<4x128xf32>, vector<8x128xf32> -> vector<8x128xf32>
    %c0_8 = arith.constant 0 : index
    %c0_9 = arith.constant 0 : index
    %c0_10 = arith.constant 0 : index
    %7 = vector.load %arg3[%c0_8, %c0_9, %c0_10] : memref<4x128x512xf32, #tpu.memory_space<vmem>>, vector<1x128x512xf32>
    %8 = vector.shape_cast %7 : vector<1x128x512xf32> to vector<128x512xf32>
    %cst_11 = arith.constant dense<0.000000e+00> : vector<8x512xf32>
    %9 = tpu.matmul %6, %8, %cst_11 {dimension_numbers = #tpu.dot_dimension_numbers<[1], [0], [0], [1], [0, 0, 1, 1], [], []>} : vector<8x128xf32>, vector<128x512xf32>, vector<8x512xf32> -> vector<8x512xf32>
    %10 = arith.addf %3, %9 : vector<8x512xf32>
    %c1 = arith.constant 1 : index
    %c0_12 = arith.constant 0 : index
    %c0_13 = arith.constant 0 : index
    %11 = vector.load %arg4[%c1, %c0_12, %c0_13] : memref<4x8x4xf32, #tpu.memory_space<vmem>>, vector<1x8x4xf32>
    %12 = vector.shape_cast %11 : vector<1x8x4xf32> to vector<8x4xf32>
    %cst_14 = arith.constant dense<0.000000e+00> : vector<8x128xf32>
    %13 = tpu.matmul %12, %2, %cst_14 {dimension_numbers = #tpu.dot_dimension_numbers<[1], [0], [0], [1], [0, 0, 1, 1], [], []>} : vector<8x4xf32>, vector<4x128xf32>, vector<8x128xf32> -> vector<8x128xf32>
    %c1_15 = arith.constant 1 : index
    %c0_16 = arith.constant 0 : index
    %c0_17 = arith.constant 0 : index
    %14 = vector.load %arg3[%c1_15, %c0_16, %c0_17] : memref<4x128x512xf32, #tpu.memory_space<vmem>>, vector<1x128x512xf32>
    %15 = vector.shape_cast %14 : vector<1x128x512xf32> to vector<128x512xf32>
    %cst_18 = arith.constant dense<0.000000e+00> : vector<8x512xf32>
    %16 = tpu.matmul %13, %15, %cst_18 {dimension_numbers = #tpu.dot_dimension_numbers<[1], [0], [0], [1], [0, 0, 1, 1], [], []>} : vector<8x128xf32>, vector<128x512xf32>, vector<8x512xf32> -> vector<8x512xf32>
    %17 = arith.addf %10, %16 : vector<8x512xf32>
    %c2 = arith.constant 2 : index
    %c0_19 = arith.constant 0 : index
    %c0_20 = arith.constant 0 : index
    %18 = vector.load %arg4[%c2, %c0_19, %c0_20] : memref<4x8x4xf32, #tpu.memory_space<vmem>>, vector<1x8x4xf32>
    %19 = vector.shape_cast %18 : vector<1x8x4xf32> to vector<8x4xf32>
    %cst_21 = arith.constant dense<0.000000e+00> : vector<8x128xf32>
    %20 = tpu.matmul %19, %2, %cst_21 {dimension_numbers = #tpu.dot_dimension_numbers<[1], [0], [0], [1], [0, 0, 1, 1], [], []>} : vector<8x4xf32>, vector<4x128xf32>, vector<8x128xf32> -> vector<8x128xf32>
    %c2_22 = arith.constant 2 : index
    %c0_23 = arith.constant 0 : index
    %c0_24 = arith.constant 0 : index
    %21 = vector.load %arg3[%c2_22, %c0_23, %c0_24] : memref<4x128x512xf32, #tpu.memory_space<vmem>>, vector<1x128x512xf32>
    %22 = vector.shape_cast %21 : vector<1x128x512xf32> to vector<128x512xf32>
    %cst_25 = arith.constant dense<0.000000e+00> : vector<8x512xf32>
    %23 = tpu.matmul %20, %22, %cst_25 {dimension_numbers = #tpu.dot_dimension_numbers<[1], [0], [0], [1], [0, 0, 1, 1], [], []>} : vector<8x128xf32>, vector<128x512xf32>, vector<8x512xf32> -> vector<8x512xf32>
    %24 = arith.addf %17, %23 : vector<8x512xf32>
    %c3 = arith.constant 3 : index
    %c0_26 = arith.constant 0 : index
    %c0_27 = arith.constant 0 : index
    %25 = vector.load %arg4[%c3, %c0_26, %c0_27] : memref<4x8x4xf32, #tpu.memory_space<vmem>>, vector<1x8x4xf32>
    %26 = vector.shape_cast %25 : vector<1x8x4xf32> to vector<8x4xf32>
    %cst_28 = arith.constant dense<0.000000e+00> : vector<8x128xf32>
    %27 = tpu.matmul %26, %2, %cst_28 {dimension_numbers = #tpu.dot_dimension_numbers<[1], [0], [0], [1], [0, 0, 1, 1], [], []>} : vector<8x4xf32>, vector<4x128xf32>, vector<8x128xf32> -> vector<8x128xf32>
    %c3_29 = arith.constant 3 : index
    %c0_30 = arith.constant 0 : index
    %c0_31 = arith.constant 0 : index
    %28 = vector.load %arg3[%c3_29, %c0_30, %c0_31] : memref<4x128x512xf32, #tpu.memory_space<vmem>>, vector<1x128x512xf32>
    %29 = vector.shape_cast %28 : vector<1x128x512xf32> to vector<128x512xf32>
    %cst_32 = arith.constant dense<0.000000e+00> : vector<8x512xf32>
    %30 = tpu.matmul %27, %29, %cst_32 {dimension_numbers = #tpu.dot_dimension_numbers<[1], [0], [0], [1], [0, 0, 1, 1], [], []>} : vector<8x128xf32>, vector<128x512xf32>, vector<8x512xf32> -> vector<8x512xf32>
    %31 = arith.addf %24, %30 : vector<8x512xf32>
    %32 = vector.broadcast %0 : vector<8x1xf32> to vector<8x512xf32>
    %33 = arith.addf %31, %32 : vector<8x512xf32>
    %c0_33 = arith.constant 0 : index
    %c0_34 = arith.constant 0 : index
    %c0_35 = arith.constant 0 : index
    %34 = vector.load %arg6[%c0_33, %c0_34, %c0_35] : memref<1x8x1024xf32, #tpu.memory_space<vmem>>, vector<1x8x512xf32>
    %35 = vector.shape_cast %34 : vector<1x8x512xf32> to vector<8x512xf32>
    %36 = vector.shape_cast %33 : vector<8x512xf32> to vector<1x8x512xf32>
    tpu.vector_store %arg6[%c0_33, %c0_34, %c0_35], %36 {strides = array<i32>} : memref<1x8x1024xf32, #tpu.memory_space<vmem>>, vector<1x8x512xf32>,
    %c0_36 = arith.constant 0 : index
    %c0_37 = arith.constant 0 : index
    %c128 = arith.constant 128 : index
    %37 = vector.load %arg2[%c0_36, %c0_37, %c128] : memref<1x4x256xf32, #tpu.memory_space<vmem>>, vector<1x4x128xf32>
    %38 = vector.shape_cast %37 : vector<1x4x128xf32> to vector<4x128xf32>
    %cst_38 = arith.constant 0.000000e+00 : f32
    %39 = vector.broadcast %cst_38 : f32 to vector<8x512xf32>
    %c0_39 = arith.constant 0 : index
    %c0_40 = arith.constant 0 : index
    %c0_41 = arith.constant 0 : index
    %40 = vector.load %arg4[%c0_39, %c0_40, %c0_41] : memref<4x8x4xf32, #tpu.memory_space<vmem>>, vector<1x8x4xf32>
    %41 = vector.shape_cast %40 : vector<1x8x4xf32> to vector<8x4xf32>
    %cst_42 = arith.constant dense<0.000000e+00> : vector<8x128xf32>
    %42 = tpu.matmul %41, %38, %cst_42 {dimension_numbers = #tpu.dot_dimension_numbers<[1], [0], [0], [1], [0, 0, 1, 1], [], []>} : vector<8x4xf32>, vector<4x128xf32>, vector<8x128xf32> -> vector<8x128xf32>
    %c0_43 = arith.constant 0 : index
    %c0_44 = arith.constant 0 : index
    %c0_45 = arith.constant 0 : index
    %43 = vector.load %arg3[%c0_43, %c0_44, %c0_45] : memref<4x128x512xf32, #tpu.memory_space<vmem>>, vector<1x128x512xf32>
    %44 = vector.shape_cast %43 : vector<1x128x512xf32> to vector<128x512xf32>
    %cst_46 = arith.constant dense<0.000000e+00> : vector<8x512xf32>
    %45 = tpu.matmul %42, %44, %cst_46 {dimension_numbers = #tpu.dot_dimension_numbers<[1], [0], [0], [1], [0, 0, 1, 1], [], []>} : vector<8x128xf32>, vector<128x512xf32>, vector<8x512xf32> -> vector<8x512xf32>
    %46 = arith.addf %39, %45 : vector<8x512xf32>
    %c1_47 = arith.constant 1 : index
    %c0_48 = arith.constant 0 : index
    %c0_49 = arith.constant 0 : index
    %47 = vector.load %arg4[%c1_47, %c0_48, %c0_49] : memref<4x8x4xf32, #tpu.memory_space<vmem>>, vector<1x8x4xf32>
    %48 = vector.shape_cast %47 : vector<1x8x4xf32> to vector<8x4xf32>
    %cst_50 = arith.constant dense<0.000000e+00> : vector<8x128xf32>
    %49 = tpu.matmul %48, %38, %cst_50 {dimension_numbers = #tpu.dot_dimension_numbers<[1], [0], [0], [1], [0, 0, 1, 1], [], []>} : vector<8x4xf32>, vector<4x128xf32>, vector<8x128xf32> -> vector<8x128xf32>
    %c1_51 = arith.constant 1 : index
    %c0_52 = arith.constant 0 : index
    %c0_53 = arith.constant 0 : index
    %50 = vector.load %arg3[%c1_51, %c0_52, %c0_53] : memref<4x128x512xf32, #tpu.memory_space<vmem>>, vector<1x128x512xf32>
    %51 = vector.shape_cast %50 : vector<1x128x512xf32> to vector<128x512xf32>
    %cst_54 = arith.constant dense<0.000000e+00> : vector<8x512xf32>
    %52 = tpu.matmul %49, %51, %cst_54 {dimension_numbers = #tpu.dot_dimension_numbers<[1], [0], [0], [1], [0, 0, 1, 1], [], []>} : vector<8x128xf32>, vector<128x512xf32>, vector<8x512xf32> -> vector<8x512xf32>
    %53 = arith.addf %46, %52 : vector<8x512xf32>
    %c2_55 = arith.constant 2 : index
    %c0_56 = arith.constant 0 : index
    %c0_57 = arith.constant 0 : index
    %54 = vector.load %arg4[%c2_55, %c0_56, %c0_57] : memref<4x8x4xf32, #tpu.memory_space<vmem>>, vector<1x8x4xf32>
    %55 = vector.shape_cast %54 : vector<1x8x4xf32> to vector<8x4xf32>
    %cst_58 = arith.constant dense<0.000000e+00> : vector<8x128xf32>
    %56 = tpu.matmul %55, %38, %cst_58 {dimension_numbers = #tpu.dot_dimension_numbers<[1], [0], [0], [1], [0, 0, 1, 1], [], []>} : vector<8x4xf32>, vector<4x128xf32>, vector<8x128xf32> -> vector<8x128xf32>
    %c2_59 = arith.constant 2 : index
    %c0_60 = arith.constant 0 : index
    %c0_61 = arith.constant 0 : index
    %57 = vector.load %arg3[%c2_59, %c0_60, %c0_61] : memref<4x128x512xf32, #tpu.memory_space<vmem>>, vector<1x128x512xf32>
    %58 = vector.shape_cast %57 : vector<1x128x512xf32> to vector<128x512xf32>
    %cst_62 = arith.constant dense<0.000000e+00> : vector<8x512xf32>
    %59 = tpu.matmul %56, %58, %cst_62 {dimension_numbers = #tpu.dot_dimension_numbers<[1], [0], [0], [1], [0, 0, 1, 1], [], []>} : vector<8x128xf32>, vector<128x512xf32>, vector<8x512xf32> -> vector<8x512xf32>
    %60 = arith.addf %53, %59 : vector<8x512xf32>
    %c3_63 = arith.constant 3 : index
    %c0_64 = arith.constant 0 : index
    %c0_65 = arith.constant 0 : index
    %61 = vector.load %arg4[%c3_63, %c0_64, %c0_65] : memref<4x8x4xf32, #tpu.memory_space<vmem>>, vector<1x8x4xf32>
    %62 = vector.shape_cast %61 : vector<1x8x4xf32> to vector<8x4xf32>
    %cst_66 = arith.constant dense<0.000000e+00> : vector<8x128xf32>
    %63 = tpu.matmul %62, %38, %cst_66 {dimension_numbers = #tpu.dot_dimension_numbers<[1], [0], [0], [1], [0, 0, 1, 1], [], []>} : vector<8x4xf32>, vector<4x128xf32>, vector<8x128xf32> -> vector<8x128xf32>
    %c3_67 = arith.constant 3 : index
    %c0_68 = arith.constant 0 : index
    %c0_69 = arith.constant 0 : index
    %64 = vector.load %arg3[%c3_67, %c0_68, %c0_69] : memref<4x128x512xf32, #tpu.memory_space<vmem>>, vector<1x128x512xf32>
    %65 = vector.shape_cast %64 : vector<1x128x512xf32> to vector<128x512xf32>
    %cst_70 = arith.constant dense<0.000000e+00> : vector<8x512xf32>
    %66 = tpu.matmul %63, %65, %cst_70 {dimension_numbers = #tpu.dot_dimension_numbers<[1], [0], [0], [1], [0, 0, 1, 1], [], []>} : vector<8x128xf32>, vector<128x512xf32>, vector<8x512xf32> -> vector<8x512xf32>
    %67 = arith.addf %60, %66 : vector<8x512xf32>
    %68 = vector.broadcast %0 : vector<8x1xf32> to vector<8x512xf32>
    %69 = arith.addf %67, %68 : vector<8x512xf32>
    %c0_71 = arith.constant 0 : index
    %c0_72 = arith.constant 0 : index
    %c512 = arith.constant 512 : index
    %70 = vector.load %arg6[%c0_71, %c0_72, %c512] : memref<1x8x1024xf32, #tpu.memory_space<vmem>>, vector<1x8x512xf32>
    %71 = vector.shape_cast %70 : vector<1x8x512xf32> to vector<8x512xf32>
    %72 = vector.shape_cast %69 : vector<8x512xf32> to vector<1x8x512xf32>
    tpu.vector_store %arg6[%c0_71, %c0_72, %c512], %72 {strides = array<i32>} : memref<1x8x1024xf32, #tpu.memory_space<vmem>>, vector<1x8x512xf32>,
    return
  }
  func.func @transform_0(%arg0: i32, %arg1: i32) -> (i32, i32, i32) {
    %c0_i32 = arith.constant 0 : i32
    %c0_i32_0 = arith.constant 0 : i32
    return %arg0, %c0_i32, %arg1 : i32, i32, i32
  }
  func.func @transform_1(%arg0: i32, %arg1: i32) -> (i32, i32, i32) {
    %c0_i32 = arith.constant 0 : i32
    %c0_i32_0 = arith.constant 0 : i32
    %c0_i32_1 = arith.constant 0 : i32
    %c0_i32_2 = arith.constant 0 : i32
    return %c0_i32, %c0_i32_0, %c0_i32_1 : i32, i32, i32
  }
  func.func @transform_2(%arg0: i32, %arg1: i32) -> (i32, i32, i32) {
    %c0_i32 = arith.constant 0 : i32
    %c0_i32_0 = arith.constant 0 : i32
    %c0_i32_1 = arith.constant 0 : i32
    %c0_i32_2 = arith.constant 0 : i32
    return %c0_i32, %c0_i32_0, %c0_i32_1 : i32, i32, i32
  }
  func.func @transform_3(%arg0: i32, %arg1: i32) -> (i32, i32) {
    %c0_i32 = arith.constant 0 : i32
    %c0_i32_0 = arith.constant 0 : i32
    %c0_i32_1 = arith.constant 0 : i32
    return %c0_i32, %c0_i32_0 : i32, i32
  }
  func.func @transform_4(%arg0: i32, %arg1: i32) -> (i32, i32, i32) {
    %c0_i32 = arith.constant 0 : i32
    %c0_i32_0 = arith.constant 0 : i32
    return %arg0, %c0_i32, %arg1 : i32, i32, i32
  }
}

</mosaic_0001>

<llo_original>
// kernel: tpu_custom_call.1
$region0: #{tpu_custom_call.1}
  #allocation0 [shape = 'u32[]', space=smem, size = 0x4, offset = 0x4, fixed_abs, tag = 'smem constant byte address 0x4 - core index']
  #allocation1 [shape = 'u32[144,128]{1,0:T(1,128)}', space=vmem, size = 0x12000, scoped, tag = 'internal scratch']
  %s0 = inlined_call_operand.vmem [shape: f32[2,4,256], index: 0, kind: input, shape index: {}]
  %s1 = inlined_call_operand.hbm [shape: f32[4,128,512], index: 1, kind: input, shape index: {}]
  %s2 = inlined_call_operand.vmem [shape: f32[4,8,4], index: 2, kind: input, shape index: {}]
  %s3 = inlined_call_operand.vmem [shape: f32[8,1], index: 3, kind: input, shape index: {}]
  %s4 = inlined_call_operand.hbm [shape: f32[2,8,1024], index: 4, kind: output, shape index: {}]
  %s5 = sld [smem:[#allocation0]]
  $region53: #{tpu_custom_call.1} parent=0
    _
  %s7 = ssub.s32 1, %s5
  %s8 = scalar_select 0, %s7, %s5
  $region1: #{tpu_custom_call.1} parent=0
    #allocation2 [shape = 'u8[1048576]{0}', space=vmem, size = 0x100000, scoped, tag = 'input window, operand 1, single buffered']
    #allocation3 [shape = 's32[2]{0}', space=sflag, size = 0x8, scoped, tag = 'scoped memory for tpu_custom_call.1']
    #allocation4 [shape = 's32[2]{0}', space=sflag, size = 0x8, scoped, tag = 'scoped memory for tpu_custom_call.1']
    #allocation5 [shape = 'u8[65536]{0}', space=vmem, size = 0x10000, scoped, tag = 'output window, operand 0']
    %9 = vsyncpa [#allocation3], 0
    %10 = vsyncpa [#allocation4], 0
    %s11 = scalar_lea.sflag [#allocation4], 1
    %12 = vsyncpa %s11, 0
    loop: start=0, step=1, limit=4
    $region2: #{tpu_custom_call.1} parent=1 // loop_pre_header
      _
    $region3: #{tpu_custom_call.1} parent=1 // loop_header
      %s14 = sphi 0, %s18
      %p15 = scmp.ge.s32.totalorder %s14, 4
      %s21 = sphi 0, %s33
      %s22 = sphi 0, %s29
      %s23 = sphi 0, %s21
      %s24 = sphi 0, %s22
      %s25 = sphi 0, %s23
      %s26 = sphi 0, %s24
      %s38 = sphi 0, %s40
      %s41 = sphi 0, %s38
      %s42 = sphi 0, %s41
      %s58 = sphi 0, %s42
      %s62 = sphi 0, %s62
      %s64 = sphi 0, %s62
      %s65 = sphi 0, %s64
      %s79 = sphi 0, %s65
      %s83 = sphi 0, %s83
      %s85 = sphi 0, %s83
      %s86 = sphi 0, %s85
      %s100 = sphi 0, %s86
      %s104 = sphi 0, %s104
      %s106 = sphi 0, %s104
      %s107 = sphi 0, %s106
      %s121 = sphi 0, %s107
      %s129 = sphi 0, %s131
      %s132 = sphi 0, %s129
      %s133 = sphi 0, %s132
      %s149 = sphi 0, %s133
    $region4: #{tpu_custom_call.1} parent=1 // loop_header_branch
      %17 = sbr.rel (%p15) target = $region8
    $region5: #{tpu_custom_call.1} parent=1 // loop_body
      %s19 = ssub.s32 %s14, 1
      %s20 = ssub.s32 %s14, 2
      %s27 = sadd.s32 1, %s22
      %p28 = scmp.ge.s32.totalorder %s27, 1
      %s29 = scalar_select %p28, 0, %s27
      %s30 = sadd.s32 1, %s21
      %s31 = scalar_select %p28, %s30, %s21
      %p32 = scmp.ge.s32.totalorder %s31, 2
      %s33 = scalar_select %p32, 0, %s31
      %s34 = ssub.s32 %s21, %s33
      %s35 = ssub.s32 %s22, %s29
      %s36 = sor.u32 %s34, %s35
      %p37 = scmp.eq.s32.totalorder %s36, 0
      %s39 = sadd.s32 %s38, 1
      %s40 = scalar_select %p37, %s38, %s39
      %p43 = pneg %p37
      %p44 = scmp.eq.s32.totalorder %s14, 1
      %p45 = por %p43, %p44
      %p46 = scmp.ne.s32.totalorder %s38, %s41
      %p47 = scmp.eq.s32.totalorder %s14, 0
      %p48 = por %p46, %p47
      %p49 = scmp.ne.s32.totalorder %s38, %s41
      %p50 = scmp.eq.s32.totalorder %s19, 1
      %p51 = por %p49, %p50
      %p52 = scmp.ne.s32.totalorder %s41, %s42
      %p53 = scmp.eq.s32.totalorder %s19, 0
      %p54 = por %p52, %p53
      %p55 = scmp.ne.s32.totalorder %s41, %s42
      %p56 = scmp.eq.s32.totalorder %s20, 1
      %p57 = por %p55, %p56
      %p59 = scmp.ne.s32.totalorder %s42, %s58
      %p60 = scmp.eq.s32.totalorder %s20, 0
      %p61 = por %p59, %p60
      %s63 = sadd.s32 %s62, 1
      %p66 = scmp.eq.s32.totalorder %s14, 1
      %p67 = scmp.ne.s32.totalorder %s62, %s64
      %p68 = scmp.eq.s32.totalorder %s14, 0
      %p69 = por %p67, %p68
      %p70 = scmp.ne.s32.totalorder %s62, %s64
      %p71 = scmp.eq.s32.totalorder %s19, 1
      %p72 = por %p70, %p71
      %p73 = scmp.ne.s32.totalorder %s64, %s65
      %p74 = scmp.eq.s32.totalorder %s19, 0
      %p75 = por %p73, %p74
      %p76 = scmp.ne.s32.totalorder %s64, %s65
      %p77 = scmp.eq.s32.totalorder %s20, 1
      %p78 = por %p76, %p77
      %p80 = scmp.ne.s32.totalorder %s65, %s79
      %p81 = scmp.eq.s32.totalorder %s20, 0
      %p82 = por %p80, %p81
      %s84 = sadd.s32 %s83, 1
      %p87 = scmp.eq.s32.totalorder %s14, 1
      %p88 = scmp.ne.s32.totalorder %s83, %s85
      %p89 = scmp.eq.s32.totalorder %s14, 0
      %p90 = por %p88, %p89
      %p91 = scmp.ne.s32.totalorder %s83, %s85
      %p92 = scmp.eq.s32.totalorder %s19, 1
      %p93 = por %p91, %p92
      %p94 = scmp.ne.s32.totalorder %s85, %s86
      %p95 = scmp.eq.s32.totalorder %s19, 0
      %p96 = por %p94, %p95
      %p97 = scmp.ne.s32.totalorder %s85, %s86
      %p98 = scmp.eq.s32.totalorder %s20, 1
      %p99 = por %p97, %p98
      %p101 = scmp.ne.s32.totalorder %s86, %s100
      %p102 = scmp.eq.s32.totalorder %s20, 0
      %p103 = por %p101, %p102
      %s105 = sadd.s32 %s104, 1
      %p108 = scmp.eq.s32.totalorder %s14, 1
      %p109 = scmp.ne.s32.totalorder %s104, %s106
      %p110 = scmp.eq.s32.totalorder %s14, 0
      %p111 = por %p109, %p110
      %p112 = scmp.ne.s32.totalorder %s104, %s106
      %p113 = scmp.eq.s32.totalorder %s19, 1
      %p114 = por %p112, %p113
      %p115 = scmp.ne.s32.totalorder %s106, %s107
      %p116 = scmp.eq.s32.totalorder %s19, 0
      %p117 = por %p115, %p116
      %p118 = scmp.ne.s32.totalorder %s106, %s107
      %p119 = scmp.eq.s32.totalorder %s20, 1
      %p120 = por %p118, %p119
      %p122 = scmp.ne.s32.totalorder %s107, %s121
      %p123 = scmp.eq.s32.totalorder %s20, 0
      %p124 = por %p122, %p123
      %s125 = ssub.s32 %s21, %s33
      %s126 = ssub.s32 %s22, %s29
      %s127 = sor.u32 %s125, %s126
      %p128 = scmp.eq.s32.totalorder %s127, 0
      %s130 = sadd.s32 %s129, 1
      %s131 = scalar_select %p128, %s129, %s130
      %p134 = pneg %p128
      %p135 = scmp.eq.s32.totalorder %s14, 1
      %p136 = por %p134, %p135
      %p137 = scmp.ne.s32.totalorder %s129, %s132
      %p138 = scmp.eq.s32.totalorder %s14, 0
      %p139 = por %p137, %p138
      %p140 = scmp.ne.s32.totalorder %s129, %s132
      %p141 = scmp.eq.s32.totalorder %s19, 1
      %p142 = por %p140, %p141
      %p143 = scmp.ne.s32.totalorder %s132, %s133
      %p144 = scmp.eq.s32.totalorder %s19, 0
      %p145 = por %p143, %p144
      %p146 = scmp.ne.s32.totalorder %s132, %s133
      %p147 = scmp.eq.s32.totalorder %s20, 1
      %p148 = por %p146, %p147
      %p150 = scmp.ne.s32.totalorder %s133, %s149
      %p151 = scmp.eq.s32.totalorder %s20, 0
      %p152 = por %p150, %p151
      %p153 = scmp.le.s32.totalorder 1, %s14
      %p154 = scmp.lt.s32.totalorder %s14, 3
      %p155 = pnand %p153, %p154
      %p156 = pneg %p155
      // Predicated region
      $region9: #{tpu_custom_call.1} parent=5 // pred_check
        _
      $region10: #{tpu_custom_call.1} parent=5 // pred_check_branch
        %158 = sbr.rel (%p155) target = $region12
      $region11: #{tpu_custom_call.1} parent=5 // pred_region
        %s159 = ssub.s32 %s14, 1
        // Predicated region
        $region13: #{tpu_custom_call.1} parent=11 // pred_check
          %p160 = pneg %p75
        $region14: #{tpu_custom_call.1} parent=11 // pred_check_branch
          %162 = sbr.rel (%p160) target = $region16
        $region15: #{tpu_custom_call.1} parent=11 // pred_region
          %s164 = ssub.s32 32768, 32768
          %165 = vsyncadd [#allocation3], %s164
          %s166 = sshll.u32 [#allocation2], 4
          %s167 = int_to_ptr.vmem [resolvable:$true] %s166
          %172 = dma.hbm_to_vmem [thread:$0]  %s1, 32768, %s167, [#allocation3], 512, 512, 32
        $region16: #{tpu_custom_call.1} parent=11 // pred_fallthru
          _
        // Predicated region
        $region17: #{tpu_custom_call.1} parent=11 // pred_check
          %p173 = pneg %p96
        $region18: #{tpu_custom_call.1} parent=11 // pred_check_branch
          %175 = sbr.rel (%p173) target = $region20
        $region19: #{tpu_custom_call.1} parent=11 // pred_region
          _
        $region20: #{tpu_custom_call.1} parent=11 // pred_fallthru
          _
        // Predicated region
        $region21: #{tpu_custom_call.1} parent=11 // pred_check
          %p176 = pneg %p117
        $region22: #{tpu_custom_call.1} parent=11 // pred_check_branch
          %178 = sbr.rel (%p176) target = $region24
        $region23: #{tpu_custom_call.1} parent=11 // pred_region
          _
        $region24: #{tpu_custom_call.1} parent=11 // pred_fallthru
          _
      $region12: #{tpu_custom_call.1} parent=5 // pred_fallthru
        _
      %p179 = scmp.lt.s32.totalorder %s14, 2
      // Predicated region
      $region25: #{tpu_custom_call.1} parent=5 // pred_check
        %p180 = pneg %p179
      $region26: #{tpu_custom_call.1} parent=5 // pred_check_branch
        %182 = sbr.rel (%p180) target = $region28
      $region27: #{tpu_custom_call.1} parent=5 // pred_region
        // Predicated region
        $region29: #{tpu_custom_call.1} parent=27 // pred_check
          %p183 = pneg %p48
        $region30: #{tpu_custom_call.1} parent=27 // pred_check_branch
          %185 = sbr.rel (%p183) target = $region32
        $region31: #{tpu_custom_call.1} parent=27 // pred_region
          %s186 = smul.u32 2, %s22
          %p187 = scmp.lt.s32.totalorder %s21, 1
          %s188 = scalar_select %p187, %s21, 1
          %p189 = scmp.lt.s32.totalorder %s186, 1
          %s190 = scalar_select %p189, %s186, 1
          %s191 = smul.addr %s188, 2
          %s192 = sadd.s32 %s190, %s191
          %s193 = smul.addr %s192, 4
          %s194 = scalar_lea.vmem %s0, %s193
          %s195 = smul.u32 2, %s22
        $region32: #{tpu_custom_call.1} parent=27 // pred_fallthru
          _
      $region28: #{tpu_custom_call.1} parent=5 // pred_fallthru
        _
      %p196 = scmp.le.s32.totalorder 1, %s14
      %p197 = scmp.lt.s32.totalorder %s14, 3
      %p198 = pnand %p196, %p197
      %p199 = pneg %p198
      // Predicated region
      $region33: #{tpu_custom_call.1} parent=5 // pred_check
        _
      $region34: #{tpu_custom_call.1} parent=5 // pred_check_branch
        %201 = sbr.rel (%p198) target = $region36
      $region35: #{tpu_custom_call.1} parent=5 // pred_region
        %s202 = ssub.s32 %s14, 1
        // Predicated region
        $region37: #{tpu_custom_call.1} parent=35 // pred_check
          %p203 = pneg %p75
        $region38: #{tpu_custom_call.1} parent=35 // pred_check_branch
          %205 = sbr.rel (%p203) target = $region40
        $region39: #{tpu_custom_call.1} parent=35 // pred_region
          %206 = dma.done [#allocation3], 32768
        $region40: #{tpu_custom_call.1} parent=35 // pred_fallthru
          _
        %s207 = smul.u32 2, %s24
        %p208 = scmp.lt.s32.totalorder %s23, 1
        %s209 = scalar_select %p208, %s23, 1
        %p210 = scmp.lt.s32.totalorder %s207, 1
        %s211 = scalar_select %p210, %s207, 1
        %s212 = smul.addr %s209, 2
        %s213 = sadd.s32 %s211, %s212
        %s214 = smul.addr %s213, 4
        %s215 = scalar_lea.vmem %s0, %s214
        %p216 = pneg %p54
        %p217 = pneg %p51
        %p218 = pneg %p75
        %p219 = pneg %p72
        %p220 = pneg %p96
        %p221 = pneg %p93
        %p222 = pneg %p117
        %p223 = pneg %p114
        %p224 = pneg %p145
        %p225 = pneg %p142
        %s226 = sand.u32 %s132, 1
        %s227 = scalar_lea.sflag [#allocation4], %s226
        %s228 = sand.u32 %s132, 1
        %s229 = smul.addr %s228, 64
        %s230 = scalar_lea.vmem [#allocation5], %s229
        %s231 = smul.u32 2, %s24
        %p232 = scmp.lt.s32.totalorder %s23, 1
        %s233 = scalar_select %p232, %s23, 1
        %p234 = scmp.lt.s32.totalorder %s231, 1
        %s235 = scalar_select %p234, %s231, 1
        %s236 = smul.addr %s233, 2
        %s237 = sadd.s32 %s235, %s236
        %s238 = smul.addr %s237, 4
        %s239 = scalar_lea.vmem %s0, %s238
        %s240 = smul.u32 2, %s24
        %s241 = smul.u32 8, %s24
        %v242 = vld [vmem:[%s3] sm:$0xff]
        %v243 = vld [vmem:[%s239] sm:$0xf]
        %v244 = vld [vmem:[%s2] sm:$0xff]
        %vm245 = vcmask 31744
        %v247 = vsel %vm245, %v244, 0
        %vm249 = vcmask 1043456
        %v251 = vsel %vm249, %v243, 0
        %253 = vmatprep.subr.mxu0 0.0
        %254 = vmatpush1.msra.mxu0 %v251
        %255 = vmatprep.subr.mxu0 0.0
        %256 = vmatpush1.msra.mxu0 0.0
        %257 = vmatprep.subr.mxu0 0.0
        %258 = vmatpush1.msra.mxu0 0.0
        %259 = vmatprep.subr.mxu0 0.0
        %260 = vmatpush1.msra.mxu0 0.0
        %261 = vmatprep.subr.mxu0 0.0
        %262 = vmatpush1.msra.mxu0 0.0
        %263 = vmatprep.subr.mxu0 0.0
        %264 = vmatpush1.msra.mxu0 0.0
        %265 = vmatprep.subr.mxu0 0.0
        %266 = vmatpush1.msra.mxu0 0.0
        %267 = vmatprep.subr.mxu0 0.0
        %268 = vmatpush1.msra.mxu0 0.0
        %269 = vmatprep.subr.mxu0 0.0
        %270 = vmatpush1.msra.mxu0 0.0
        %271 = vmatprep.subr.mxu0 0.0
        %272 = vmatpush1.msra.mxu0 0.0
        %273 = vmatprep.subr.mxu0 0.0
        %274 = vmatpush1.msra.mxu0 0.0
        %275 = vmatprep.subr.mxu0 0.0
        %276 = vmatpush1.msra.mxu0 0.0
        %277 = vmatprep.subr.mxu0 0.0
        %278 = vmatpush1.msra.mxu0 0.0
        %279 = vmatprep.subr.mxu0 0.0
        %280 = vmatpush1.msra.mxu0 0.0
        %281 = vmatprep.subr.mxu0 0.0
        %282 = vmatpush1.msra.mxu0 0.0
        %283 = vmatprep.subr.mxu0 0.0
        %284 = vmatpush1.msra.mxu0 0.0
        %285 = vmatprep.subr.mxu0 0.0
        %286 = vmatpush1.msra.mxu0 0.0
        %287 = vmatprep.subr.mxu0 0.0
        %288 = vmatpush1.msra.mxu0 0.0
        %289 = vmatprep.subr.mxu0 0.0
        %290 = vmatpush1.msra.mxu0 0.0
        %291 = vmatprep.subr.mxu0 0.0
        %292 = vmatpush1.msra.mxu0 0.0
        %293 = vmatprep.subr.mxu0 0.0
        %294 = vmatpush1.msra.mxu0 0.0
        %295 = vmatprep.subr.mxu0 0.0
        %296 = vmatpush1.msra.mxu0 0.0
        %297 = vmatprep.subr.mxu0 0.0
        %298 = vmatpush1.msra.mxu0 0.0
        %299 = vmatprep.subr.mxu0 0.0
        %300 = vmatpush1.msra.mxu0 0.0
        %301 = vmatprep.subr.mxu0 0.0
        %302 = vmatpush1.msra.mxu0 0.0
        %303 = vmatprep.subr.mxu0 0.0
        %304 = vmatpush1.msra.mxu0 0.0
        %305 = vmatprep.subr.mxu0 0.0
        %306 = vmatpush1.msra.mxu0 0.0
        %307 = vmatprep.subr.mxu0 0.0
        %308 = vmatpush1.msra.mxu0 0.0
        %309 = vmatprep.subr.mxu0 0.0
        %310 = vmatpush1.msra.mxu0 0.0
        %311 = vmatprep.subr.mxu0 0.0
        %312 = vmatpush1.msra.mxu0 0.0
        %313 = vmatprep.subr.mxu0 0.0
        %314 = vmatpush1.msra.mxu0 0.0
        %315 = vmatprep.subr.mxu0 0.0
        %316 = vmatpush1.msra.mxu0 0.0
        %317 = vmatprep.mubr.f32.mxu0 0.0
        %318 = vmatmul.mubr.f32.gmra.mrb[0].mxu0 %v247
        %v319 = vpop.f32.mrb[0].mxu0
        %v320 = vadd.f32 0.0, %v319
        %v321 = vpop.f32.mrb[0].mxu0
        %322 = vdwg.mxu0
        %v323 = vld [vmem:[#allocation2] sm:$0xff]
        %v324 = vld [vmem:[#allocation2 + $0x8] sm:$0xff]
        %v325 = vld [vmem:[#allocation2 + $0x10] sm:$0xff]
        %v326 = vld [vmem:[#allocation2 + $0x18] sm:$0xff]
        %v327 = vld [vmem:[#allocation2 + $0x20] sm:$0xff]
        %v328 = vld [vmem:[#allocation2 + $0x28] sm:$0xff]
        %v329 = vld [vmem:[#allocation2 + $0x30] sm:$0xff]
        %v330 = vld [vmem:[#allocation2 + $0x38] sm:$0xff]
        %v331 = vld [vmem:[#allocation2 + $0x40] sm:$0xff]
        %v332 = vld [vmem:[#allocation2 + $0x48] sm:$0xff]
        %v333 = vld [vmem:[#allocation2 + $0x50] sm:$0xff]
        %v334 = vld [vmem:[#allocation2 + $0x58] sm:$0xff]
        %v335 = vld [vmem:[#allocation2 + $0x60] sm:$0xff]
        %v336 = vld [vmem:[#allocation2 + $0x68] sm:$0xff]
        %v337 = vld [vmem:[#allocation2 + $0x70] sm:$0xff]
        %v338 = vld [vmem:[#allocation2 + $0x78] sm:$0xff]
        %v339 = vld [vmem:[#allocation2 + $0x80] sm:$0xff]
        %v340 = vld [vmem:[#allocation2 + $0x88] sm:$0xff]
        %v341 = vld [vmem:[#allocation2 + $0x90] sm:$0xff]
        %v342 = vld [vmem:[#allocation2 + $0x98] sm:$0xff]
        %v343 = vld [vmem:[#allocation2 + $0xa0] sm:$0xff]
        %v344 = vld [vmem:[#allocation2 + $0xa8] sm:$0xff]
        %v345 = vld [vmem:[#allocation2 + $0xb0] sm:$0xff]
        %v346 = vld [vmem:[#allocation2 + $0xb8] sm:$0xff]
        %v347 = vld [vmem:[#allocation2 + $0xc0] sm:$0xff]
        %v348 = vld [vmem:[#allocation2 + $0xc8] sm:$0xff]
        %v349 = vld [vmem:[#allocation2 + $0xd0] sm:$0xff]
        %v350 = vld [vmem:[#allocation2 + $0xd8] sm:$0xff]
        %v351 = vld [vmem:[#allocation2 + $0xe0] sm:$0xff]
        %v352 = vld [vmem:[#allocation2 + $0xe8] sm:$0xff]
        %v353 = vld [vmem:[#allocation2 + $0xf0] sm:$0xff]
        %v354 = vld [vmem:[#allocation2 + $0xf8] sm:$0xff]
        %v355 = vld [vmem:[#allocation2 + $0x100] sm:$0xff]
        %v356 = vld [vmem:[#allocation2 + $0x108] sm:$0xff]
        %v357 = vld [vmem:[#allocation2 + $0x110] sm:$0xff]
        %v358 = vld [vmem:[#allocation2 + $0x118] sm:$0xff]
        %v359 = vld [vmem:[#allocation2 + $0x120] sm:$0xff]
        %v360 = vld [vmem:[#allocation2 + $0x128] sm:$0xff]
        %v361 = vld [vmem:[#allocation2 + $0x130] sm:$0xff]
        %v362 = vld [vmem:[#allocation2 + $0x138] sm:$0xff]
        %v363 = vld [vmem:[#allocation2 + $0x140] sm:$0xff]
        %v364 = vld [vmem:[#allocation2 + $0x148] sm:$0xff]
        %v365 = vld [vmem:[#allocation2 + $0x150] sm:$0xff]
        %v366 = vld [vmem:[#allocation2 + $0x158] sm:$0xff]
        %v367 = vld [vmem:[#allocation2 + $0x160] sm:$0xff]
        %v368 = vld [vmem:[#allocation2 + $0x168] sm:$0xff]
        %v369 = vld [vmem:[#allocation2 + $0x170] sm:$0xff]
        %v370 = vld [vmem:[#allocation2 + $0x178] sm:$0xff]
        %v371 = vld [vmem:[#allocation2 + $0x180] sm:$0xff]
        %v372 = vld [vmem:[#allocation2 + $0x188] sm:$0xff]
        %v373 = vld [vmem:[#allocation2 + $0x190] sm:$0xff]
        %v374 = vld [vmem:[#allocation2 + $0x198] sm:$0xff]
        %v375 = vld [vmem:[#allocation2 + $0x1a0] sm:$0xff]
        %v376 = vld [vmem:[#allocation2 + $0x1a8] sm:$0xff]
        %v377 = vld [vmem:[#allocation2 + $0x1b0] sm:$0xff]
        %v378 = vld [vmem:[#allocation2 + $0x1b8] sm:$0xff]
        %v379 = vld [vmem:[#allocation2 + $0x1c0] sm:$0xff]
        %v380 = vld [vmem:[#allocation2 + $0x1c8] sm:$0xff]
        %v381 = vld [vmem:[#allocation2 + $0x1d0] sm:$0xff]
        %v382 = vld [vmem:[#allocation2 + $0x1d8] sm:$0xff]
        %v383 = vld [vmem:[#allocation2 + $0x1e0] sm:$0xff]
        %v384 = vld [vmem:[#allocation2 + $0x1e8] sm:$0xff]
        %v385 = vld [vmem:[#allocation2 + $0x1f0] sm:$0xff]
        %v386 = vld [vmem:[#allocation2 + $0x1f8] sm:$0xff]
        %s387 = scalar_lea.vmem %s2, 8
        %v388 = vld [vmem:[%s387] sm:$0xff]
        %v390 = vsel %vm245, %v388, 0
        %392 = vmatprep.subr.mxu0 0.0
        %393 = vmatpush1.msra.mxu0 %v251
        %394 = vmatprep.subr.mxu0 0.0
        %395 = vmatpush1.msra.mxu0 0.0
        %396 = vmatprep.subr.mxu0 0.0
        %397 = vmatpush1.msra.mxu0 0.0
        %398 = vmatprep.subr.mxu0 0.0
        %399 = vmatpush1.msra.mxu0 0.0
        %400 = vmatprep.subr.mxu0 0.0
        %401 = vmatpush1.msra.mxu0 0.0
        %402 = vmatprep.subr.mxu0 0.0
        %403 = vmatpush1.msra.mxu0 0.0
        %404 = vmatprep.subr.mxu0 0.0
        %405 = vmatpush1.msra.mxu0 0.0
        %406 = vmatprep.subr.mxu0 0.0
        %407 = vmatpush1.msra.mxu0 0.0
        %408 = vmatprep.subr.mxu0 0.0
        %409 = vmatpush1.msra.mxu0 0.0
        %410 = vmatprep.subr.mxu0 0.0
        %411 = vmatpush1.msra.mxu0 0.0
        %412 = vmatprep.subr.mxu0 0.0
        %413 = vmatpush1.msra.mxu0 0.0
        %414 = vmatprep.subr.mxu0 0.0
        %415 = vmatpush1.msra.mxu0 0.0
        %416 = vmatprep.subr.mxu0 0.0
        %417 = vmatpush1.msra.mxu0 0.0
        %418 = vmatprep.subr.mxu0 0.0
        %419 = vmatpush1.msra.mxu0 0.0
        %420 = vmatprep.subr.mxu0 0.0
        %421 = vmatpush1.msra.mxu0 0.0
        %422 = vmatprep.subr.mxu0 0.0
        %423 = vmatpush1.msra.mxu0 0.0
        %424 = vmatprep.subr.mxu0 0.0
        %425 = vmatpush1.msra.mxu0 0.0
        %426 = vmatprep.subr.mxu0 0.0
        %427 = vmatpush1.msra.mxu0 0.0
        %428 = vmatprep.subr.mxu0 0.0
        %429 = vmatpush1.msra.mxu0 0.0
        %430 = vmatprep.subr.mxu0 0.0
        %431 = vmatpush1.msra.mxu0 0.0
        %432 = vmatprep.subr.mxu0 0.0
        %433 = vmatpush1.msra.mxu0 0.0
        %434 = vmatprep.subr.mxu0 0.0
        %435 = vmatpush1.msra.mxu0 0.0
        %436 = vmatprep.subr.mxu0 0.0
        %437 = vmatpush1.msra.mxu0 0.0
        %438 = vmatprep.subr.mxu0 0.0
        %439 = vmatpush1.msra.mxu0 0.0
        %440 = vmatprep.subr.mxu0 0.0
        %441 = vmatpush1.msra.mxu0 0.0
        %442 = vmatprep.subr.mxu0 0.0
        %443 = vmatpush1.msra.mxu0 0.0
        %444 = vmatprep.subr.mxu0 0.0
        %445 = vmatpush1.msra.mxu0 0.0
        %446 = vmatprep.subr.mxu0 0.0
        %447 = vmatpush1.msra.mxu0 0.0
        %448 = vmatprep.subr.mxu0 0.0
        %449 = vmatpush1.msra.mxu0 0.0
        %450 = vmatprep.subr.mxu0 0.0
        %451 = vmatpush1.msra.mxu0 0.0
        %452 = vmatprep.subr.mxu0 0.0
        %453 = vmatpush1.msra.mxu0 0.0
        %454 = vmatprep.subr.mxu0 0.0
        %455 = vmatpush1.msra.mxu0 0.0
        %456 = vmatprep.mubr.f32.mxu0 0.0
        %457 = vmatmul.mubr.f32.gmra.mrb[0].mxu0 %v390
        %v458 = vpop.f32.mrb[0].mxu0
        %v459 = vadd.f32 0.0, %v458
        %v460 = vpop.f32.mrb[0].mxu0
        %461 = vdwg.mxu0
        %s462 = scalar_lea.vmem [#allocation2], 512
        %v463 = vld [vmem:[%s462] sm:$0xff]
        %v464 = vld [vmem:[%s462 + $0x8] sm:$0xff]
        %v465 = vld [vmem:[%s462 + $0x10] sm:$0xff]
        %v466 = vld [vmem:[%s462 + $0x18] sm:$0xff]
        %v467 = vld [vmem:[%s462 + $0x20] sm:$0xff]
        %v468 = vld [vmem:[%s462 + $0x28] sm:$0xff]
        %v469 = vld [vmem:[%s462 + $0x30] sm:$0xff]
        %v470 = vld [vmem:[%s462 + $0x38] sm:$0xff]
        %v471 = vld [vmem:[%s462 + $0x40] sm:$0xff]
        %v472 = vld [vmem:[%s462 + $0x48] sm:$0xff]
        %v473 = vld [vmem:[%s462 + $0x50] sm:$0xff]
        %v474 = vld [vmem:[%s462 + $0x58] sm:$0xff]
        %v475 = vld [vmem:[%s462 + $0x60] sm:$0xff]
        %v476 = vld [vmem:[%s462 + $0x68] sm:$0xff]
        %v477 = vld [vmem:[%s462 + $0x70] sm:$0xff]
        %v478 = vld [vmem:[%s462 + $0x78] sm:$0xff]
        %v479 = vld [vmem:[%s462 + $0x80] sm:$0xff]
        %v480 = vld [vmem:[%s462 + $0x88] sm:$0xff]
        %v481 = vld [vmem:[%s462 + $0x90] sm:$0xff]
        %v482 = vld [vmem:[%s462 + $0x98] sm:$0xff]
        %v483 = vld [vmem:[%s462 + $0xa0] sm:$0xff]
        %v484 = vld [vmem:[%s462 + $0xa8] sm:$0xff]
        %v485 = vld [vmem:[%s462 + $0xb0] sm:$0xff]
        %v486 = vld [vmem:[%s462 + $0xb8] sm:$0xff]
        %v487 = vld [vmem:[%s462 + $0xc0] sm:$0xff]
        %v488 = vld [vmem:[%s462 + $0xc8] sm:$0xff]
        %v489 = vld [vmem:[%s462 + $0xd0] sm:$0xff]
        %v490 = vld [vmem:[%s462 + $0xd8] sm:$0xff]
        %v491 = vld [vmem:[%s462 + $0xe0] sm:$0xff]
        %v492 = vld [vmem:[%s462 + $0xe8] sm:$0xff]
        %v493 = vld [vmem:[%s462 + $0xf0] sm:$0xff]
        %v494 = vld [vmem:[%s462 + $0xf8] sm:$0xff]
        %v495 = vld [vmem:[%s462 + $0x100] sm:$0xff]
        %v496 = vld [vmem:[%s462 + $0x108] sm:$0xff]
        %v497 = vld [vmem:[%s462 + $0x110] sm:$0xff]
        %v498 = vld [vmem:[%s462 + $0x118] sm:$0xff]
        %v499 = vld [vmem:[%s462 + $0x120] sm:$0xff]
        %v500 = vld [vmem:[%s462 + $0x128] sm:$0xff]
        %v501 = vld [vmem:[%s462 + $0x130] sm:$0xff]
        %v502 = vld [vmem:[%s462 + $0x138] sm:$0xff]
        %v503 = vld [vmem:[%s462 + $0x140] sm:$0xff]
        %v504 = vld [vmem:[%s462 + $0x148] sm:$0xff]
        %v505 = vld [vmem:[%s462 + $0x150] sm:$0xff]
        %v506 = vld [vmem:[%s462 + $0x158] sm:$0xff]
        %v507 = vld [vmem:[%s462 + $0x160] sm:$0xff]
        %v508 = vld [vmem:[%s462 + $0x168] sm:$0xff]
        %v509 = vld [vmem:[%s462 + $0x170] sm:$0xff]
        %v510 = vld [vmem:[%s462 + $0x178] sm:$0xff]
        %v511 = vld [vmem:[%s462 + $0x180] sm:$0xff]
        %v512 = vld [vmem:[%s462 + $0x188] sm:$0xff]
        %v513 = vld [vmem:[%s462 + $0x190] sm:$0xff]
        %v514 = vld [vmem:[%s462 + $0x198] sm:$0xff]
        %v515 = vld [vmem:[%s462 + $0x1a0] sm:$0xff]
        %v516 = vld [vmem:[%s462 + $0x1a8] sm:$0xff]
        %v517 = vld [vmem:[%s462 + $0x1b0] sm:$0xff]
        %v518 = vld [vmem:[%s462 + $0x1b8] sm:$0xff]
        %v519 = vld [vmem:[%s462 + $0x1c0] sm:$0xff]
        %v520 = vld [vmem:[%s462 + $0x1c8] sm:$0xff]
        %v521 = vld [vmem:[%s462 + $0x1d0] sm:$0xff]
        %v522 = vld [vmem:[%s462 + $0x1d8] sm:$0xff]
        %v523 = vld [vmem:[%s462 + $0x1e0] sm:$0xff]
        %v524 = vld [vmem:[%s462 + $0x1e8] sm:$0xff]
        %v525 = vld [vmem:[%s462 + $0x1f0] sm:$0xff]
        %v526 = vld [vmem:[%s462 + $0x1f8] sm:$0xff]
        %527 = vmatprep.subr.mxu0 %v464
        %528 = vmatpush1.msra.mxu0 %v463
        %529 = vmatprep.subr.mxu0 %v468
        %530 = vmatpush1.msra.mxu0 %v467
        %531 = vmatprep.subr.mxu0 %v472
        %532 = vmatpush1.msra.mxu0 %v471
        %533 = vmatprep.subr.mxu0 %v476
        %534 = vmatpush1.msra.mxu0 %v475
        %535 = vmatprep.subr.mxu0 %v480
        %536 = vmatpush1.msra.mxu0 %v479
        %537 = vmatprep.subr.mxu0 %v484
        %538 = vmatpush1.msra.mxu0 %v483
        %539 = vmatprep.subr.mxu0 %v488
        %540 = vmatpush1.msra.mxu0 %v487
        %541 = vmatprep.subr.mxu0 %v492
        %542 = vmatpush1.msra.mxu0 %v491
        %543 = vmatprep.subr.mxu0 %v496
        %544 = vmatpush1.msra.mxu0 %v495
        %545 = vmatprep.subr.mxu0 %v500
        %546 = vmatpush1.msra.mxu0 %v499
        %547 = vmatprep.subr.mxu0 %v504
        %548 = vmatpush1.msra.mxu0 %v503
        %549 = vmatprep.subr.mxu0 %v508
        %550 = vmatpush1.msra.mxu0 %v507
        %551 = vmatprep.subr.mxu0 %v512
        %552 = vmatpush1.msra.mxu0 %v511
        %553 = vmatprep.subr.mxu0 %v516
        %554 = vmatpush1.msra.mxu0 %v515
        %555 = vmatprep.subr.mxu0 %v520
        %556 = vmatpush1.msra.mxu0 %v519
        %557 = vmatprep.subr.mxu0 %v524
        %558 = vmatpush1.msra.mxu0 %v523
        %559 = vmatprep.subr.mxu0 0.0
        %560 = vmatpush1.msra.mxu0 0.0
        %561 = vmatprep.subr.mxu0 0.0
        %562 = vmatpush1.msra.mxu0 0.0
        %563 = vmatprep.subr.mxu0 0.0
        %564 = vmatpush1.msra.mxu0 0.0
        %565 = vmatprep.subr.mxu0 0.0
        %566 = vmatpush1.msra.mxu0 0.0
        %567 = vmatprep.subr.mxu0 0.0
        %568 = vmatpush1.msra.mxu0 0.0
        %569 = vmatprep.subr.mxu0 0.0
        %570 = vmatpush1.msra.mxu0 0.0
        %571 = vmatprep.subr.mxu0 0.0
        %572 = vmatpush1.msra.mxu0 0.0
        %573 = vmatprep.subr.mxu0 0.0
        %574 = vmatpush1.msra.mxu0 0.0
        %575 = vmatprep.subr.mxu0 0.0
        %576 = vmatpush1.msra.mxu0 0.0
        %577 = vmatprep.subr.mxu0 0.0
        %578 = vmatpush1.msra.mxu0 0.0
        %579 = vmatprep.subr.mxu0 0.0
        %580 = vmatpush1.msra.mxu0 0.0
        %581 = vmatprep.subr.mxu0 0.0
        %582 = vmatpush1.msra.mxu0 0.0
        %583 = vmatprep.subr.mxu0 0.0
        %584 = vmatpush1.msra.mxu0 0.0
        %585 = vmatprep.subr.mxu0 0.0
        %586 = vmatpush1.msra.mxu0 0.0
        %587 = vmatprep.subr.mxu0 0.0
        %588 = vmatpush1.msra.mxu0 0.0
        %589 = vmatprep.subr.mxu0 0.0
        %590 = vmatpush1.msra.mxu0 0.0
        %591 = vmatprep.mubr.f32.mxu0 0.0
        %592 = vmatmul.mubr.f32.gmra.mrb[0].mxu0 %v459
        %v593 = vpop.f32.mrb[0].mxu0
        %v594 = vadd.f32 0.0, %v593
        %v595 = vpop.f32.mrb[0].mxu0
        %v596 = vadd.f32 0.0, %v595
        %597 = vdwg.mxu0
        %598 = vmatprep.subr.mxu0 %v466
        %599 = vmatpush1.msra.mxu0 %v465
        %600 = vmatprep.subr.mxu0 %v470
        %601 = vmatpush1.msra.mxu0 %v469
        %602 = vmatprep.subr.mxu0 %v474
        %603 = vmatpush1.msra.mxu0 %v473
        %604 = vmatprep.subr.mxu0 %v478
        %605 = vmatpush1.msra.mxu0 %v477
        %606 = vmatprep.subr.mxu0 %v482
        %607 = vmatpush1.msra.mxu0 %v481
        %608 = vmatprep.subr.mxu0 %v486
        %609 = vmatpush1.msra.mxu0 %v485
        %610 = vmatprep.subr.mxu0 %v490
        %611 = vmatpush1.msra.mxu0 %v489
        %612 = vmatprep.subr.mxu0 %v494
        %613 = vmatpush1.msra.mxu0 %v493
        %614 = vmatprep.subr.mxu0 %v498
        %615 = vmatpush1.msra.mxu0 %v497
        %616 = vmatprep.subr.mxu0 %v502
        %617 = vmatpush1.msra.mxu0 %v501
        %618 = vmatprep.subr.mxu0 %v506
        %619 = vmatpush1.msra.mxu0 %v505
        %620 = vmatprep.subr.mxu0 %v510
        %621 = vmatpush1.msra.mxu0 %v509
        %622 = vmatprep.subr.mxu0 %v514
        %623 = vmatpush1.msra.mxu0 %v513
        %624 = vmatprep.subr.mxu0 %v518
        %625 = vmatpush1.msra.mxu0 %v517
        %626 = vmatprep.subr.mxu0 %v522
        %627 = vmatpush1.msra.mxu0 %v521
        %628 = vmatprep.subr.mxu0 %v526
        %629 = vmatpush1.msra.mxu0 %v525
        %630 = vmatprep.subr.mxu0 0.0
        %631 = vmatpush1.msra.mxu0 0.0
        %632 = vmatprep.subr.mxu0 0.0
        %633 = vmatpush1.msra.mxu0 0.0
        %634 = vmatprep.subr.mxu0 0.0
        %635 = vmatpush1.msra.mxu0 0.0
        %636 = vmatprep.subr.mxu0 0.0
        %637 = vmatpush1.msra.mxu0 0.0
        %638 = vmatprep.subr.mxu0 0.0
        %639 = vmatpush1.msra.mxu0 0.0
        %640 = vmatprep.subr.mxu0 0.0
        %641 = vmatpush1.msra.mxu0 0.0
        %642 = vmatprep.subr.mxu0 0.0
        %643 = vmatpush1.msra.mxu0 0.0
        %644 = vmatprep.subr.mxu0 0.0
        %645 = vmatpush1.msra.mxu0 0.0
        %646 = vmatprep.subr.mxu0 0.0
        %647 = vmatpush1.msra.mxu0 0.0
        %648 = vmatprep.subr.mxu0 0.0
        %649 = vmatpush1.msra.mxu0 0.0
        %650 = vmatprep.subr.mxu0 0.0
        %651 = vmatpush1.msra.mxu0 0.0
        %652 = vmatprep.subr.mxu0 0.0
        %653 = vmatpush1.msra.mxu0 0.0
        %654 = vmatprep.subr.mxu0 0.0
        %655 = vmatpush1.msra.mxu0 0.0
        %656 = vmatprep.subr.mxu0 0.0
        %657 = vmatpush1.msra.mxu0 0.0
        %658 = vmatprep.subr.mxu0 0.0
        %659 = vmatpush1.msra.mxu0 0.0
        %660 = vmatprep.subr.mxu0 0.0
        %661 = vmatpush1.msra.mxu0 0.0
        %662 = vmatprep.mubr.f32.mxu0 0.0
        %663 = vmatmul.mubr.f32.gmra.mrb[0].mxu0 %v459
        %v664 = vpop.f32.mrb[0].mxu0
        %v665 = vadd.f32 0.0, %v664
        %v666 = vpop.f32.mrb[0].mxu0
        %v667 = vadd.f32 0.0, %v666
        %668 = vdwg.mxu0
        %669 = vmatprep.subr.mxu0 %v324
        %670 = vmatpush1.msra.mxu0 %v323
        %671 = vmatprep.subr.mxu0 %v328
        %672 = vmatpush1.msra.mxu0 %v327
        %673 = vmatprep.subr.mxu0 %v332
        %674 = vmatpush1.msra.mxu0 %v331
        %675 = vmatprep.subr.mxu0 %v336
        %676 = vmatpush1.msra.mxu0 %v335
        %677 = vmatprep.subr.mxu0 %v340
        %678 = vmatpush1.msra.mxu0 %v339
        %679 = vmatprep.subr.mxu0 %v344
        %680 = vmatpush1.msra.mxu0 %v343
        %681 = vmatprep.subr.mxu0 %v348
        %682 = vmatpush1.msra.mxu0 %v347
        %683 = vmatprep.subr.mxu0 %v352
        %684 = vmatpush1.msra.mxu0 %v351
        %685 = vmatprep.subr.mxu0 %v356
        %686 = vmatpush1.msra.mxu0 %v355
        %687 = vmatprep.subr.mxu0 %v360
        %688 = vmatpush1.msra.mxu0 %v359
        %689 = vmatprep.subr.mxu0 %v364
        %690 = vmatpush1.msra.mxu0 %v363
        %691 = vmatprep.subr.mxu0 %v368
        %692 = vmatpush1.msra.mxu0 %v367
        %693 = vmatprep.subr.mxu0 %v372
        %694 = vmatpush1.msra.mxu0 %v371
        %695 = vmatprep.subr.mxu0 %v376
        %696 = vmatpush1.msra.mxu0 %v375
        %697 = vmatprep.subr.mxu0 %v380
        %698 = vmatpush1.msra.mxu0 %v379
        %699 = vmatprep.subr.mxu0 %v384
        %700 = vmatpush1.msra.mxu0 %v383
        %701 = vmatprep.subr.mxu0 0.0
        %702 = vmatpush1.msra.mxu0 0.0
        %703 = vmatprep.subr.mxu0 0.0
        %704 = vmatpush1.msra.mxu0 0.0
        %705 = vmatprep.subr.mxu0 0.0
        %706 = vmatpush1.msra.mxu0 0.0
        %707 = vmatprep.subr.mxu0 0.0
        %708 = vmatpush1.msra.mxu0 0.0
        %709 = vmatprep.subr.mxu0 0.0
        %710 = vmatpush1.msra.mxu0 0.0
        %711 = vmatprep.subr.mxu0 0.0
        %712 = vmatpush1.msra.mxu0 0.0
        %713 = vmatprep.subr.mxu0 0.0
        %714 = vmatpush1.msra.mxu0 0.0
        %715 = vmatprep.subr.mxu0 0.0
        %716 = vmatpush1.msra.mxu0 0.0
        %717 = vmatprep.subr.mxu0 0.0
        %718 = vmatpush1.msra.mxu0 0.0
        %719 = vmatprep.subr.mxu0 0.0
        %720 = vmatpush1.msra.mxu0 0.0
        %721 = vmatprep.subr.mxu0 0.0
        %722 = vmatpush1.msra.mxu0 0.0
        %723 = vmatprep.subr.mxu0 0.0
        %724 = vmatpush1.msra.mxu0 0.0
        %725 = vmatprep.subr.mxu0 0.0
        %726 = vmatpush1.msra.mxu0 0.0
        %727 = vmatprep.subr.mxu0 0.0
        %728 = vmatpush1.msra.mxu0 0.0
        %729 = vmatprep.subr.mxu0 0.0
        %730 = vmatpush1.msra.mxu0 0.0
        %731 = vmatprep.subr.mxu0 0.0
        %732 = vmatpush1.msra.mxu0 0.0
        %733 = vmatprep.mubr.f32.mxu0 0.0
        %734 = vmatmul.mubr.f32.gmra.mrb[0].mxu0 %v320
        %v735 = vpop.f32.mrb[0].mxu0
        %v736 = vadd.f32 %v594, %v735
        %v737 = vpop.f32.mrb[0].mxu0
        %v738 = vadd.f32 %v596, %v737
        %739 = vdwg.mxu0
        %740 = vmatprep.subr.mxu0 %v326
        %741 = vmatpush1.msra.mxu0 %v325
        %742 = vmatprep.subr.mxu0 %v330
        %743 = vmatpush1.msra.mxu0 %v329
        %744 = vmatprep.subr.mxu0 %v334
        %745 = vmatpush1.msra.mxu0 %v333
        %746 = vmatprep.subr.mxu0 %v338
        %747 = vmatpush1.msra.mxu0 %v337
        %748 = vmatprep.subr.mxu0 %v342
        %749 = vmatpush1.msra.mxu0 %v341
        %750 = vmatprep.subr.mxu0 %v346
        %751 = vmatpush1.msra.mxu0 %v345
        %752 = vmatprep.subr.mxu0 %v350
        %753 = vmatpush1.msra.mxu0 %v349
        %754 = vmatprep.subr.mxu0 %v354
        %755 = vmatpush1.msra.mxu0 %v353
        %756 = vmatprep.subr.mxu0 %v358
        %757 = vmatpush1.msra.mxu0 %v357
        %758 = vmatprep.subr.mxu0 %v362
        %759 = vmatpush1.msra.mxu0 %v361
        %760 = vmatprep.subr.mxu0 %v366
        %761 = vmatpush1.msra.mxu0 %v365
        %762 = vmatprep.subr.mxu0 %v370
        %763 = vmatpush1.msra.mxu0 %v369
        %764 = vmatprep.subr.mxu0 %v374
        %765 = vmatpush1.msra.mxu0 %v373
        %766 = vmatprep.subr.mxu0 %v378
        %767 = vmatpush1.msra.mxu0 %v377
        %768 = vmatprep.subr.mxu0 %v382
        %769 = vmatpush1.msra.mxu0 %v381
        %770 = vmatprep.subr.mxu0 %v386
        %771 = vmatpush1.msra.mxu0 %v385
        %772 = vmatprep.subr.mxu0 0.0
        %773 = vmatpush1.msra.mxu0 0.0
        %774 = vmatprep.subr.mxu0 0.0
        %775 = vmatpush1.msra.mxu0 0.0
        %776 = vmatprep.subr.mxu0 0.0
        %777 = vmatpush1.msra.mxu0 0.0
        %778 = vmatprep.subr.mxu0 0.0
        %779 = vmatpush1.msra.mxu0 0.0
        %780 = vmatprep.subr.mxu0 0.0
        %781 = vmatpush1.msra.mxu0 0.0
        %782 = vmatprep.subr.mxu0 0.0
        %783 = vmatpush1.msra.mxu0 0.0
        %784 = vmatprep.subr.mxu0 0.0
        %785 = vmatpush1.msra.mxu0 0.0
        %786 = vmatprep.subr.mxu0 0.0
        %787 = vmatpush1.msra.mxu0 0.0
        %788 = vmatprep.subr.mxu0 0.0
        %789 = vmatpush1.msra.mxu0 0.0
        %790 = vmatprep.subr.mxu0 0.0
        %791 = vmatpush1.msra.mxu0 0.0
        %792 = vmatprep.subr.mxu0 0.0
        %793 = vmatpush1.msra.mxu0 0.0
        %794 = vmatprep.subr.mxu0 0.0
        %795 = vmatpush1.msra.mxu0 0.0
        %796 = vmatprep.subr.mxu0 0.0
        %797 = vmatpush1.msra.mxu0 0.0
        %798 = vmatprep.subr.mxu0 0.0
        %799 = vmatpush1.msra.mxu0 0.0
        %800 = vmatprep.subr.mxu0 0.0
        %801 = vmatpush1.msra.mxu0 0.0
        %802 = vmatprep.subr.mxu0 0.0
        %803 = vmatpush1.msra.mxu0 0.0
        %804 = vmatprep.mubr.f32.mxu0 0.0
        %805 = vmatmul.mubr.f32.gmra.mrb[0].mxu0 %v320
        %v806 = vpop.f32.mrb[0].mxu0
        %v807 = vadd.f32 %v665, %v806
        %v808 = vpop.f32.mrb[0].mxu0
        %v809 = vadd.f32 %v667, %v808
        %810 = vdwg.mxu0
        %s811 = scalar_lea.vmem %s2, 16
        %v812 = vld [vmem:[%s811] sm:$0xff]
        %v814 = vsel %vm245, %v812, 0
        %816 = vmatprep.subr.mxu0 0.0
        %817 = vmatpush1.msra.mxu0 %v251
        %818 = vmatprep.subr.mxu0 0.0
        %819 = vmatpush1.msra.mxu0 0.0
        %820 = vmatprep.subr.mxu0 0.0
        %821 = vmatpush1.msra.mxu0 0.0
        %822 = vmatprep.subr.mxu0 0.0
        %823 = vmatpush1.msra.mxu0 0.0
        %824 = vmatprep.subr.mxu0 0.0
        %825 = vmatpush1.msra.mxu0 0.0
        %826 = vmatprep.subr.mxu0 0.0
        %827 = vmatpush1.msra.mxu0 0.0
        %828 = vmatprep.subr.mxu0 0.0
        %829 = vmatpush1.msra.mxu0 0.0
        %830 = vmatprep.subr.mxu0 0.0
        %831 = vmatpush1.msra.mxu0 0.0
        %832 = vmatprep.subr.mxu0 0.0
        %833 = vmatpush1.msra.mxu0 0.0
        %834 = vmatprep.subr.mxu0 0.0
        %835 = vmatpush1.msra.mxu0 0.0
        %836 = vmatprep.subr.mxu0 0.0
        %837 = vmatpush1.msra.mxu0 0.0
        %838 = vmatprep.subr.mxu0 0.0
        %839 = vmatpush1.msra.mxu0 0.0
        %840 = vmatprep.subr.mxu0 0.0
        %841 = vmatpush1.msra.mxu0 0.0
        %842 = vmatprep.subr.mxu0 0.0
        %843 = vmatpush1.msra.mxu0 0.0
        %844 = vmatprep.subr.mxu0 0.0
        %845 = vmatpush1.msra.mxu0 0.0
        %846 = vmatprep.subr.mxu0 0.0
        %847 = vmatpush1.msra.mxu0 0.0
        %848 = vmatprep.subr.mxu0 0.0
        %849 = vmatpush1.msra.mxu0 0.0
        %850 = vmatprep.subr.mxu0 0.0
        %851 = vmatpush1.msra.mxu0 0.0
        %852 = vmatprep.subr.mxu0 0.0
        %853 = vmatpush1.msra.mxu0 0.0
        %854 = vmatprep.subr.mxu0 0.0
        %855 = vmatpush1.msra.mxu0 0.0
        %856 = vmatprep.subr.mxu0 0.0
        %857 = vmatpush1.msra.mxu0 0.0
        %858 = vmatprep.subr.mxu0 0.0
        %859 = vmatpush1.msra.mxu0 0.0
        %860 = vmatprep.subr.mxu0 0.0
        %861 = vmatpush1.msra.mxu0 0.0
        %862 = vmatprep.subr.mxu0 0.0
        %863 = vmatpush1.msra.mxu0 0.0
        %864 = vmatprep.subr.mxu0 0.0
        %865 = vmatpush1.msra.mxu0 0.0
        %866 = vmatprep.subr.mxu0 0.0
        %867 = vmatpush1.msra.mxu0 0.0
        %868 = vmatprep.subr.mxu0 0.0
        %869 = vmatpush1.msra.mxu0 0.0
        %870 = vmatprep.subr.mxu0 0.0
        %871 = vmatpush1.msra.mxu0 0.0
        %872 = vmatprep.subr.mxu0 0.0
        %873 = vmatpush1.msra.mxu0 0.0
        %874 = vmatprep.subr.mxu0 0.0
        %875 = vmatpush1.msra.mxu0 0.0
        %876 = vmatprep.subr.mxu0 0.0
        %877 = vmatpush1.msra.mxu0 0.0
        %878 = vmatprep.subr.mxu0 0.0
        %879 = vmatpush1.msra.mxu0 0.0
        %880 = vmatprep.mubr.f32.mxu0 0.0
        %881 = vmatmul.mubr.f32.gmra.mrb[0].mxu0 %v814
        %v882 = vpop.f32.mrb[0].mxu0
        %v883 = vadd.f32 0.0, %v882
        %v884 = vpop.f32.mrb[0].mxu0
        %885 = vdwg.mxu0
        %s886 = scalar_lea.vmem [#allocation2], 1024
        %v887 = vld [vmem:[%s886] sm:$0xff]
        %v888 = vld [vmem:[%s886 + $0x8] sm:$0xff]
        %v889 = vld [vmem:[%s886 + $0x10] sm:$0xff]
        %v890 = vld [vmem:[%s886 + $0x18] sm:$0xff]
        %v891 = vld [vmem:[%s886 + $0x20] sm:$0xff]
        %v892 = vld [vmem:[%s886 + $0x28] sm:$0xff]
        %v893 = vld [vmem:[%s886 + $0x30] sm:$0xff]
        %v894 = vld [vmem:[%s886 + $0x38] sm:$0xff]
        %v895 = vld [vmem:[%s886 + $0x40] sm:$0xff]
        %v896 = vld [vmem:[%s886 + $0x48] sm:$0xff]
        %v897 = vld [vmem:[%s886 + $0x50] sm:$0xff]
        %v898 = vld [vmem:[%s886 + $0x58] sm:$0xff]
        %v899 = vld [vmem:[%s886 + $0x60] sm:$0xff]
        %v900 = vld [vmem:[%s886 + $0x68] sm:$0xff]
        %v901 = vld [vmem:[%s886 + $0x70] sm:$0xff]
        %v902 = vld [vmem:[%s886 + $0x78] sm:$0xff]
        %v903 = vld [vmem:[%s886 + $0x80] sm:$0xff]
        %v904 = vld [vmem:[%s886 + $0x88] sm:$0xff]
        %v905 = vld [vmem:[%s886 + $0x90] sm:$0xff]
        %v906 = vld [vmem:[%s886 + $0x98] sm:$0xff]
        %v907 = vld [vmem:[%s886 + $0xa0] sm:$0xff]
        %v908 = vld [vmem:[%s886 + $0xa8] sm:$0xff]
        %v909 = vld [vmem:[%s886 + $0xb0] sm:$0xff]
        %v910 = vld [vmem:[%s886 + $0xb8] sm:$0xff]
        %v911 = vld [vmem:[%s886 + $0xc0] sm:$0xff]
        %v912 = vld [vmem:[%s886 + $0xc8] sm:$0xff]
        %v913 = vld [vmem:[%s886 + $0xd0] sm:$0xff]
        %v914 = vld [vmem:[%s886 + $0xd8] sm:$0xff]
        %v915 = vld [vmem:[%s886 + $0xe0] sm:$0xff]
        %v916 = vld [vmem:[%s886 + $0xe8] sm:$0xff]
        %v917 = vld [vmem:[%s886 + $0xf0] sm:$0xff]
        %v918 = vld [vmem:[%s886 + $0xf8] sm:$0xff]
        %v919 = vld [vmem:[%s886 + $0x100] sm:$0xff]
        %v920 = vld [vmem:[%s886 + $0x108] sm:$0xff]
        %v921 = vld [vmem:[%s886 + $0x110] sm:$0xff]
        %v922 = vld [vmem:[%s886 + $0x118] sm:$0xff]
        %v923 = vld [vmem:[%s886 + $0x120] sm:$0xff]
        %v924 = vld [vmem:[%s886 + $0x128] sm:$0xff]
        %v925 = vld [vmem:[%s886 + $0x130] sm:$0xff]
        %v926 = vld [vmem:[%s886 + $0x138] sm:$0xff]
        %v927 = vld [vmem:[%s886 + $0x140] sm:$0xff]
        %v928 = vld [vmem:[%s886 + $0x148] sm:$0xff]
        %v929 = vld [vmem:[%s886 + $0x150] sm:$0xff]
        %v930 = vld [vmem:[%s886 + $0x158] sm:$0xff]
        %v931 = vld [vmem:[%s886 + $0x160] sm:$0xff]
        %v932 = vld [vmem:[%s886 + $0x168] sm:$0xff]
        %v933 = vld [vmem:[%s886 + $0x170] sm:$0xff]
        %v934 = vld [vmem:[%s886 + $0x178] sm:$0xff]
        %v935 = vld [vmem:[%s886 + $0x180] sm:$0xff]
        %v936 = vld [vmem:[%s886 + $0x188] sm:$0xff]
        %v937 = vld [vmem:[%s886 + $0x190] sm:$0xff]
        %v938 = vld [vmem:[%s886 + $0x198] sm:$0xff]
        %v939 = vld [vmem:[%s886 + $0x1a0] sm:$0xff]
        %v940 = vld [vmem:[%s886 + $0x1a8] sm:$0xff]
        %v941 = vld [vmem:[%s886 + $0x1b0] sm:$0xff]
        %v942 = vld [vmem:[%s886 + $0x1b8] sm:$0xff]
        %v943 = vld [vmem:[%s886 + $0x1c0] sm:$0xff]
        %v944 = vld [vmem:[%s886 + $0x1c8] sm:$0xff]
        %v945 = vld [vmem:[%s886 + $0x1d0] sm:$0xff]
        %v946 = vld [vmem:[%s886 + $0x1d8] sm:$0xff]
        %v947 = vld [vmem:[%s886 + $0x1e0] sm:$0xff]
        %v948 = vld [vmem:[%s886 + $0x1e8] sm:$0xff]
        %v949 = vld [vmem:[%s886 + $0x1f0] sm:$0xff]
        %v950 = vld [vmem:[%s886 + $0x1f8] sm:$0xff]
        %951 = vmatprep.subr.mxu0 %v888
        %952 = vmatpush1.msra.mxu0 %v887
        %953 = vmatprep.subr.mxu0 %v892
        %954 = vmatpush1.msra.mxu0 %v891
        %955 = vmatprep.subr.mxu0 %v896
        %956 = vmatpush1.msra.mxu0 %v895
        %957 = vmatprep.subr.mxu0 %v900
        %958 = vmatpush1.msra.mxu0 %v899
        %959 = vmatprep.subr.mxu0 %v904
        %960 = vmatpush1.msra.mxu0 %v903
        %961 = vmatprep.subr.mxu0 %v908
        %962 = vmatpush1.msra.mxu0 %v907
        %963 = vmatprep.subr.mxu0 %v912
        %964 = vmatpush1.msra.mxu0 %v911
        %965 = vmatprep.subr.mxu0 %v916
        %966 = vmatpush1.msra.mxu0 %v915
        %967 = vmatprep.subr.mxu0 %v920
        %968 = vmatpush1.msra.mxu0 %v919
        %969 = vmatprep.subr.mxu0 %v924
        %970 = vmatpush1.msra.mxu0 %v923
        %971 = vmatprep.subr.mxu0 %v928
        %972 = vmatpush1.msra.mxu0 %v927
        %973 = vmatprep.subr.mxu0 %v932
        %974 = vmatpush1.msra.mxu0 %v931
        %975 = vmatprep.subr.mxu0 %v936
        %976 = vmatpush1.msra.mxu0 %v935
        %977 = vmatprep.subr.mxu0 %v940
        %978 = vmatpush1.msra.mxu0 %v939
        %979 = vmatprep.subr.mxu0 %v944
        %980 = vmatpush1.msra.mxu0 %v943
        %981 = vmatprep.subr.mxu0 %v948
        %982 = vmatpush1.msra.mxu0 %v947
        %983 = vmatprep.subr.mxu0 0.0
        %984 = vmatpush1.msra.mxu0 0.0
        %985 = vmatprep.subr.mxu0 0.0
        %986 = vmatpush1.msra.mxu0 0.0
        %987 = vmatprep.subr.mxu0 0.0
        %988 = vmatpush1.msra.mxu0 0.0
        %989 = vmatprep.subr.mxu0 0.0
        %990 = vmatpush1.msra.mxu0 0.0
        %991 = vmatprep.subr.mxu0 0.0
        %992 = vmatpush1.msra.mxu0 0.0
        %993 = vmatprep.subr.mxu0 0.0
        %994 = vmatpush1.msra.mxu0 0.0
        %995 = vmatprep.subr.mxu0 0.0
        %996 = vmatpush1.msra.mxu0 0.0
        %997 = vmatprep.subr.mxu0 0.0
        %998 = vmatpush1.msra.mxu0 0.0
        %999 = vmatprep.subr.mxu0 0.0
        %1000 = vmatpush1.msra.mxu0 0.0
        %1001 = vmatprep.subr.mxu0 0.0
        %1002 = vmatpush1.msra.mxu0 0.0
        %1003 = vmatprep.subr.mxu0 0.0
        %1004 = vmatpush1.msra.mxu0 0.0
        %1005 = vmatprep.subr.mxu0 0.0
        %1006 = vmatpush1.msra.mxu0 0.0
        %1007 = vmatprep.subr.mxu0 0.0
        %1008 = vmatpush1.msra.mxu0 0.0
        %1009 = vmatprep.subr.mxu0 0.0
        %1010 = vmatpush1.msra.mxu0 0.0
        %1011 = vmatprep.subr.mxu0 0.0
        %1012 = vmatpush1.msra.mxu0 0.0
        %1013 = vmatprep.subr.mxu0 0.0
        %1014 = vmatpush1.msra.mxu0 0.0
        %1015 = vmatprep.mubr.f32.mxu0 0.0
        %1016 = vmatmul.mubr.f32.gmra.mrb[0].mxu0 %v883
        %v1017 = vpop.f32.mrb[0].mxu0
        %v1018 = vadd.f32 0.0, %v1017
        %v1019 = vpop.f32.mrb[0].mxu0
        %v1020 = vadd.f32 0.0, %v1019
        %1021 = vdwg.mxu0
        %1022 = vmatprep.subr.mxu0 %v890
        %1023 = vmatpush1.msra.mxu0 %v889
        %1024 = vmatprep.subr.mxu0 %v894
        %1025 = vmatpush1.msra.mxu0 %v893
        %1026 = vmatprep.subr.mxu0 %v898
        %1027 = vmatpush1.msra.mxu0 %v897
        %1028 = vmatprep.subr.mxu0 %v902
        %1029 = vmatpush1.msra.mxu0 %v901
        %1030 = vmatprep.subr.mxu0 %v906
        %1031 = vmatpush1.msra.mxu0 %v905
        %1032 = vmatprep.subr.mxu0 %v910
        %1033 = vmatpush1.msra.mxu0 %v909
        %1034 = vmatprep.subr.mxu0 %v914
        %1035 = vmatpush1.msra.mxu0 %v913
        %1036 = vmatprep.subr.mxu0 %v918
        %1037 = vmatpush1.msra.mxu0 %v917
        %1038 = vmatprep.subr.mxu0 %v922
        %1039 = vmatpush1.msra.mxu0 %v921
        %1040 = vmatprep.subr.mxu0 %v926
        %1041 = vmatpush1.msra.mxu0 %v925
        %1042 = vmatprep.subr.mxu0 %v930
        %1043 = vmatpush1.msra.mxu0 %v929
        %1044 = vmatprep.subr.mxu0 %v934
        %1045 = vmatpush1.msra.mxu0 %v933
        %1046 = vmatprep.subr.mxu0 %v938
        %1047 = vmatpush1.msra.mxu0 %v937
        %1048 = vmatprep.subr.mxu0 %v942
        %1049 = vmatpush1.msra.mxu0 %v941
        %1050 = vmatprep.subr.mxu0 %v946
        %1051 = vmatpush1.msra.mxu0 %v945
        %1052 = vmatprep.subr.mxu0 %v950
        %1053 = vmatpush1.msra.mxu0 %v949
        %1054 = vmatprep.subr.mxu0 0.0
        %1055 = vmatpush1.msra.mxu0 0.0
        %1056 = vmatprep.subr.mxu0 0.0
        %1057 = vmatpush1.msra.mxu0 0.0
        %1058 = vmatprep.subr.mxu0 0.0
        %1059 = vmatpush1.msra.mxu0 0.0
        %1060 = vmatprep.subr.mxu0 0.0
        %1061 = vmatpush1.msra.mxu0 0.0
        %1062 = vmatprep.subr.mxu0 0.0
        %1063 = vmatpush1.msra.mxu0 0.0
        %1064 = vmatprep.subr.mxu0 0.0
        %1065 = vmatpush1.msra.mxu0 0.0
        %1066 = vmatprep.subr.mxu0 0.0
        %1067 = vmatpush1.msra.mxu0 0.0
        %1068 = vmatprep.subr.mxu0 0.0
        %1069 = vmatpush1.msra.mxu0 0.0
        %1070 = vmatprep.subr.mxu0 0.0
        %1071 = vmatpush1.msra.mxu0 0.0
        %1072 = vmatprep.subr.mxu0 0.0
        %1073 = vmatpush1.msra.mxu0 0.0
        %1074 = vmatprep.subr.mxu0 0.0
        %1075 = vmatpush1.msra.mxu0 0.0
        %1076 = vmatprep.subr.mxu0 0.0
        %1077 = vmatpush1.msra.mxu0 0.0
        %1078 = vmatprep.subr.mxu0 0.0
        %1079 = vmatpush1.msra.mxu0 0.0
        %1080 = vmatprep.subr.mxu0 0.0
        %1081 = vmatpush1.msra.mxu0 0.0
        %1082 = vmatprep.subr.mxu0 0.0
        %1083 = vmatpush1.msra.mxu0 0.0
        %1084 = vmatprep.subr.mxu0 0.0
        %1085 = vmatpush1.msra.mxu0 0.0
        %1086 = vmatprep.mubr.f32.mxu0 0.0
        %1087 = vmatmul.mubr.f32.gmra.mrb[0].mxu0 %v883
        %v1088 = vpop.f32.mrb[0].mxu0
        %v1089 = vadd.f32 0.0, %v1088
        %v1090 = vpop.f32.mrb[0].mxu0
        %v1091 = vadd.f32 0.0, %v1090
        %1092 = vdwg.mxu0
        %v1093 = vadd.f32 %v736, %v1018
        %v1094 = vadd.f32 %v738, %v1020
        %v1095 = vadd.f32 %v807, %v1089
        %v1096 = vadd.f32 %v809, %v1091
        %s1097 = scalar_lea.vmem %s2, 24
        %v1098 = vld [vmem:[%s1097] sm:$0xff]
        %v1100 = vsel %vm245, %v1098, 0
        %1102 = vmatprep.subr.mxu0 0.0
        %1103 = vmatpush1.msra.mxu0 %v251
        %1104 = vmatprep.subr.mxu0 0.0
        %1105 = vmatpush1.msra.mxu0 0.0
        %1106 = vmatprep.subr.mxu0 0.0
        %1107 = vmatpush1.msra.mxu0 0.0
        %1108 = vmatprep.subr.mxu0 0.0
        %1109 = vmatpush1.msra.mxu0 0.0
        %1110 = vmatprep.subr.mxu0 0.0
        %1111 = vmatpush1.msra.mxu0 0.0
        %1112 = vmatprep.subr.mxu0 0.0
        %1113 = vmatpush1.msra.mxu0 0.0
        %1114 = vmatprep.subr.mxu0 0.0
        %1115 = vmatpush1.msra.mxu0 0.0
        %1116 = vmatprep.subr.mxu0 0.0
        %1117 = vmatpush1.msra.mxu0 0.0
        %1118 = vmatprep.subr.mxu0 0.0
        %1119 = vmatpush1.msra.mxu0 0.0
        %1120 = vmatprep.subr.mxu0 0.0
        %1121 = vmatpush1.msra.mxu0 0.0
        %1122 = vmatprep.subr.mxu0 0.0
        %1123 = vmatpush1.msra.mxu0 0.0
        %1124 = vmatprep.subr.mxu0 0.0
        %1125 = vmatpush1.msra.mxu0 0.0
        %1126 = vmatprep.subr.mxu0 0.0
        %1127 = vmatpush1.msra.mxu0 0.0
        %1128 = vmatprep.subr.mxu0 0.0
        %1129 = vmatpush1.msra.mxu0 0.0
        %1130 = vmatprep.subr.mxu0 0.0
        %1131 = vmatpush1.msra.mxu0 0.0
        %1132 = vmatprep.subr.mxu0 0.0
        %1133 = vmatpush1.msra.mxu0 0.0
        %1134 = vmatprep.subr.mxu0 0.0
        %1135 = vmatpush1.msra.mxu0 0.0
        %1136 = vmatprep.subr.mxu0 0.0
        %1137 = vmatpush1.msra.mxu0 0.0
        %1138 = vmatprep.subr.mxu0 0.0
        %1139 = vmatpush1.msra.mxu0 0.0
        %1140 = vmatprep.subr.mxu0 0.0
        %1141 = vmatpush1.msra.mxu0 0.0
        %1142 = vmatprep.subr.mxu0 0.0
        %1143 = vmatpush1.msra.mxu0 0.0
        %1144 = vmatprep.subr.mxu0 0.0
        %1145 = vmatpush1.msra.mxu0 0.0
        %1146 = vmatprep.subr.mxu0 0.0
        %1147 = vmatpush1.msra.mxu0 0.0
        %1148 = vmatprep.subr.mxu0 0.0
        %1149 = vmatpush1.msra.mxu0 0.0
        %1150 = vmatprep.subr.mxu0 0.0
        %1151 = vmatpush1.msra.mxu0 0.0
        %1152 = vmatprep.subr.mxu0 0.0
        %1153 = vmatpush1.msra.mxu0 0.0
        %1154 = vmatprep.subr.mxu0 0.0
        %1155 = vmatpush1.msra.mxu0 0.0
        %1156 = vmatprep.subr.mxu0 0.0
        %1157 = vmatpush1.msra.mxu0 0.0
        %1158 = vmatprep.subr.mxu0 0.0
        %1159 = vmatpush1.msra.mxu0 0.0
        %1160 = vmatprep.subr.mxu0 0.0
        %1161 = vmatpush1.msra.mxu0 0.0
        %1162 = vmatprep.subr.mxu0 0.0
        %1163 = vmatpush1.msra.mxu0 0.0
        %1164 = vmatprep.subr.mxu0 0.0
        %1165 = vmatpush1.msra.mxu0 0.0
        %1166 = vmatprep.mubr.f32.mxu0 0.0
        %1167 = vmatmul.mubr.f32.gmra.mrb[0].mxu0 %v1100
        %v1168 = vpop.f32.mrb[0].mxu0
        %v1169 = vadd.f32 0.0, %v1168
        %v1170 = vpop.f32.mrb[0].mxu0
        %1171 = vdwg.mxu0
        %s1172 = scalar_lea.vmem [#allocation2], 1536
        %v1173 = vld [vmem:[%s1172] sm:$0xff]
        %v1174 = vld [vmem:[%s1172 + $0x8] sm:$0xff]
        %v1175 = vld [vmem:[%s1172 + $0x10] sm:$0xff]
        %v1176 = vld [vmem:[%s1172 + $0x18] sm:$0xff]
        %v1177 = vld [vmem:[%s1172 + $0x20] sm:$0xff]
        %v1178 = vld [vmem:[%s1172 + $0x28] sm:$0xff]
        %v1179 = vld [vmem:[%s1172 + $0x30] sm:$0xff]
        %v1180 = vld [vmem:[%s1172 + $0x38] sm:$0xff]
        %v1181 = vld [vmem:[%s1172 + $0x40] sm:$0xff]
        %v1182 = vld [vmem:[%s1172 + $0x48] sm:$0xff]
        %v1183 = vld [vmem:[%s1172 + $0x50] sm:$0xff]
        %v1184 = vld [vmem:[%s1172 + $0x58] sm:$0xff]
        %v1185 = vld [vmem:[%s1172 + $0x60] sm:$0xff]
        %v1186 = vld [vmem:[%s1172 + $0x68] sm:$0xff]
        %v1187 = vld [vmem:[%s1172 + $0x70] sm:$0xff]
        %v1188 = vld [vmem:[%s1172 + $0x78] sm:$0xff]
        %v1189 = vld [vmem:[%s1172 + $0x80] sm:$0xff]
        %v1190 = vld [vmem:[%s1172 + $0x88] sm:$0xff]
        %v1191 = vld [vmem:[%s1172 + $0x90] sm:$0xff]
        %v1192 = vld [vmem:[%s1172 + $0x98] sm:$0xff]
        %v1193 = vld [vmem:[%s1172 + $0xa0] sm:$0xff]
        %v1194 = vld [vmem:[%s1172 + $0xa8] sm:$0xff]
        %v1195 = vld [vmem:[%s1172 + $0xb0] sm:$0xff]
        %v1196 = vld [vmem:[%s1172 + $0xb8] sm:$0xff]
        %v1197 = vld [vmem:[%s1172 + $0xc0] sm:$0xff]
        %v1198 = vld [vmem:[%s1172 + $0xc8] sm:$0xff]
        %v1199 = vld [vmem:[%s1172 + $0xd0] sm:$0xff]
        %v1200 = vld [vmem:[%s1172 + $0xd8] sm:$0xff]
        %v1201 = vld [vmem:[%s1172 + $0xe0] sm:$0xff]
        %v1202 = vld [vmem:[%s1172 + $0xe8] sm:$0xff]
        %v1203 = vld [vmem:[%s1172 + $0xf0] sm:$0xff]
        %v1204 = vld [vmem:[%s1172 + $0xf8] sm:$0xff]
        %v1205 = vld [vmem:[%s1172 + $0x100] sm:$0xff]
        %v1206 = vld [vmem:[%s1172 + $0x108] sm:$0xff]
        %v1207 = vld [vmem:[%s1172 + $0x110] sm:$0xff]
        %v1208 = vld [vmem:[%s1172 + $0x118] sm:$0xff]
        %v1209 = vld [vmem:[%s1172 + $0x120] sm:$0xff]
        %v1210 = vld [vmem:[%s1172 + $0x128] sm:$0xff]
        %v1211 = vld [vmem:[%s1172 + $0x130] sm:$0xff]
        %v1212 = vld [vmem:[%s1172 + $0x138] sm:$0xff]
        %v1213 = vld [vmem:[%s1172 + $0x140] sm:$0xff]
        %v1214 = vld [vmem:[%s1172 + $0x148] sm:$0xff]
        %v1215 = vld [vmem:[%s1172 + $0x150] sm:$0xff]
        %v1216 = vld [vmem:[%s1172 + $0x158] sm:$0xff]
        %v1217 = vld [vmem:[%s1172 + $0x160] sm:$0xff]
        %v1218 = vld [vmem:[%s1172 + $0x168] sm:$0xff]
        %v1219 = vld [vmem:[%s1172 + $0x170] sm:$0xff]
        %v1220 = vld [vmem:[%s1172 + $0x178] sm:$0xff]
        %v1221 = vld [vmem:[%s1172 + $0x180] sm:$0xff]
        %v1222 = vld [vmem:[%s1172 + $0x188] sm:$0xff]
        %v1223 = vld [vmem:[%s1172 + $0x190] sm:$0xff]
        %v1224 = vld [vmem:[%s1172 + $0x198] sm:$0xff]
        %v1225 = vld [vmem:[%s1172 + $0x1a0] sm:$0xff]
        %v1226 = vld [vmem:[%s1172 + $0x1a8] sm:$0xff]
        %v1227 = vld [vmem:[%s1172 + $0x1b0] sm:$0xff]
        %v1228 = vld [vmem:[%s1172 + $0x1b8] sm:$0xff]
        %v1229 = vld [vmem:[%s1172 + $0x1c0] sm:$0xff]
        %v1230 = vld [vmem:[%s1172 + $0x1c8] sm:$0xff]
        %v1231 = vld [vmem:[%s1172 + $0x1d0] sm:$0xff]
        %v1232 = vld [vmem:[%s1172 + $0x1d8] sm:$0xff]
        %v1233 = vld [vmem:[%s1172 + $0x1e0] sm:$0xff]
        %v1234 = vld [vmem:[%s1172 + $0x1e8] sm:$0xff]
        %v1235 = vld [vmem:[%s1172 + $0x1f0] sm:$0xff]
        %v1236 = vld [vmem:[%s1172 + $0x1f8] sm:$0xff]
        %1237 = vmatprep.subr.mxu0 %v1174
        %1238 = vmatpush1.msra.mxu0 %v1173
        %1239 = vmatprep.subr.mxu0 %v1178
        %1240 = vmatpush1.msra.mxu0 %v1177
        %1241 = vmatprep.subr.mxu0 %v1182
        %1242 = vmatpush1.msra.mxu0 %v1181
        %1243 = vmatprep.subr.mxu0 %v1186
        %1244 = vmatpush1.msra.mxu0 %v1185
        %1245 = vmatprep.subr.mxu0 %v1190
        %1246 = vmatpush1.msra.mxu0 %v1189
        %1247 = vmatprep.subr.mxu0 %v1194
        %1248 = vmatpush1.msra.mxu0 %v1193
        %1249 = vmatprep.subr.mxu0 %v1198
        %1250 = vmatpush1.msra.mxu0 %v1197
        %1251 = vmatprep.subr.mxu0 %v1202
        %1252 = vmatpush1.msra.mxu0 %v1201
        %1253 = vmatprep.subr.mxu0 %v1206
        %1254 = vmatpush1.msra.mxu0 %v1205
        %1255 = vmatprep.subr.mxu0 %v1210
        %1256 = vmatpush1.msra.mxu0 %v1209
        %1257 = vmatprep.subr.mxu0 %v1214
        %1258 = vmatpush1.msra.mxu0 %v1213
        %1259 = vmatprep.subr.mxu0 %v1218
        %1260 = vmatpush1.msra.mxu0 %v1217
        %1261 = vmatprep.subr.mxu0 %v1222
        %1262 = vmatpush1.msra.mxu0 %v1221
        %1263 = vmatprep.subr.mxu0 %v1226
        %1264 = vmatpush1.msra.mxu0 %v1225
        %1265 = vmatprep.subr.mxu0 %v1230
        %1266 = vmatpush1.msra.mxu0 %v1229
        %1267 = vmatprep.subr.mxu0 %v1234
        %1268 = vmatpush1.msra.mxu0 %v1233
        %1269 = vmatprep.subr.mxu0 0.0
        %1270 = vmatpush1.msra.mxu0 0.0
        %1271 = vmatprep.subr.mxu0 0.0
        %1272 = vmatpush1.msra.mxu0 0.0
        %1273 = vmatprep.subr.mxu0 0.0
        %1274 = vmatpush1.msra.mxu0 0.0
        %1275 = vmatprep.subr.mxu0 0.0
        %1276 = vmatpush1.msra.mxu0 0.0
        %1277 = vmatprep.subr.mxu0 0.0
        %1278 = vmatpush1.msra.mxu0 0.0
        %1279 = vmatprep.subr.mxu0 0.0
        %1280 = vmatpush1.msra.mxu0 0.0
        %1281 = vmatprep.subr.mxu0 0.0
        %1282 = vmatpush1.msra.mxu0 0.0
        %1283 = vmatprep.subr.mxu0 0.0
        %1284 = vmatpush1.msra.mxu0 0.0
        %1285 = vmatprep.subr.mxu0 0.0
        %1286 = vmatpush1.msra.mxu0 0.0
        %1287 = vmatprep.subr.mxu0 0.0
        %1288 = vmatpush1.msra.mxu0 0.0
        %1289 = vmatprep.subr.mxu0 0.0
        %1290 = vmatpush1.msra.mxu0 0.0
        %1291 = vmatprep.subr.mxu0 0.0
        %1292 = vmatpush1.msra.mxu0 0.0
        %1293 = vmatprep.subr.mxu0 0.0
        %1294 = vmatpush1.msra.mxu0 0.0
        %1295 = vmatprep.subr.mxu0 0.0
        %1296 = vmatpush1.msra.mxu0 0.0
        %1297 = vmatprep.subr.mxu0 0.0
        %1298 = vmatpush1.msra.mxu0 0.0
        %1299 = vmatprep.subr.mxu0 0.0
        %1300 = vmatpush1.msra.mxu0 0.0
        %1301 = vmatprep.mubr.f32.mxu0 0.0
        %1302 = vmatmul.mubr.f32.gmra.mrb[0].mxu0 %v1169
        %v1303 = vpop.f32.mrb[0].mxu0
        %v1304 = vadd.f32 0.0, %v1303
        %v1305 = vpop.f32.mrb[0].mxu0
        %v1306 = vadd.f32 0.0, %v1305
        %1307 = vdwg.mxu0
        %1308 = vmatprep.subr.mxu0 %v1176
        %1309 = vmatpush1.msra.mxu0 %v1175
        %1310 = vmatprep.subr.mxu0 %v1180
        %1311 = vmatpush1.msra.mxu0 %v1179
        %1312 = vmatprep.subr.mxu0 %v1184
        %1313 = vmatpush1.msra.mxu0 %v1183
        %1314 = vmatprep.subr.mxu0 %v1188
        %1315 = vmatpush1.msra.mxu0 %v1187
        %1316 = vmatprep.subr.mxu0 %v1192
        %1317 = vmatpush1.msra.mxu0 %v1191
        %1318 = vmatprep.subr.mxu0 %v1196
        %1319 = vmatpush1.msra.mxu0 %v1195
        %1320 = vmatprep.subr.mxu0 %v1200
        %1321 = vmatpush1.msra.mxu0 %v1199
        %1322 = vmatprep.subr.mxu0 %v1204
        %1323 = vmatpush1.msra.mxu0 %v1203
        %1324 = vmatprep.subr.mxu0 %v1208
        %1325 = vmatpush1.msra.mxu0 %v1207
        %1326 = vmatprep.subr.mxu0 %v1212
        %1327 = vmatpush1.msra.mxu0 %v1211
        %1328 = vmatprep.subr.mxu0 %v1216
        %1329 = vmatpush1.msra.mxu0 %v1215
        %1330 = vmatprep.subr.mxu0 %v1220
        %1331 = vmatpush1.msra.mxu0 %v1219
        %1332 = vmatprep.subr.mxu0 %v1224
        %1333 = vmatpush1.msra.mxu0 %v1223
        %1334 = vmatprep.subr.mxu0 %v1228
        %1335 = vmatpush1.msra.mxu0 %v1227
        %1336 = vmatprep.subr.mxu0 %v1232
        %1337 = vmatpush1.msra.mxu0 %v1231
        %1338 = vmatprep.subr.mxu0 %v1236
        %1339 = vmatpush1.msra.mxu0 %v1235
        %1340 = vmatprep.subr.mxu0 0.0
        %1341 = vmatpush1.msra.mxu0 0.0
        %1342 = vmatprep.subr.mxu0 0.0
        %1343 = vmatpush1.msra.mxu0 0.0
        %1344 = vmatprep.subr.mxu0 0.0
        %1345 = vmatpush1.msra.mxu0 0.0
        %1346 = vmatprep.subr.mxu0 0.0
        %1347 = vmatpush1.msra.mxu0 0.0
        %1348 = vmatprep.subr.mxu0 0.0
        %1349 = vmatpush1.msra.mxu0 0.0
        %1350 = vmatprep.subr.mxu0 0.0
        %1351 = vmatpush1.msra.mxu0 0.0
        %1352 = vmatprep.subr.mxu0 0.0
        %1353 = vmatpush1.msra.mxu0 0.0
        %1354 = vmatprep.subr.mxu0 0.0
        %1355 = vmatpush1.msra.mxu0 0.0
        %1356 = vmatprep.subr.mxu0 0.0
        %1357 = vmatpush1.msra.mxu0 0.0
        %1358 = vmatprep.subr.mxu0 0.0
        %1359 = vmatpush1.msra.mxu0 0.0
        %1360 = vmatprep.subr.mxu0 0.0
        %1361 = vmatpush1.msra.mxu0 0.0
        %1362 = vmatprep.subr.mxu0 0.0
        %1363 = vmatpush1.msra.mxu0 0.0
        %1364 = vmatprep.subr.mxu0 0.0
        %1365 = vmatpush1.msra.mxu0 0.0
        %1366 = vmatprep.subr.mxu0 0.0
        %1367 = vmatpush1.msra.mxu0 0.0
        %1368 = vmatprep.subr.mxu0 0.0
        %1369 = vmatpush1.msra.mxu0 0.0
        %1370 = vmatprep.subr.mxu0 0.0
        %1371 = vmatpush1.msra.mxu0 0.0
        %1372 = vmatprep.mubr.f32.mxu0 0.0
        %1373 = vmatmul.mubr.f32.gmra.mrb[0].mxu0 %v1169
        %v1374 = vpop.f32.mrb[0].mxu0
        %v1375 = vadd.f32 0.0, %v1374
        %v1376 = vpop.f32.mrb[0].mxu0
        %v1377 = vadd.f32 0.0, %v1376
        %1378 = vdwg.mxu0
        %v1379 = vadd.f32 %v1093, %v1304
        %v1380 = vadd.f32 %v1094, %v1306
        %v1381 = vadd.f32 %v1095, %v1375
        %v1382 = vadd.f32 %v1096, %v1377
        %1384 = vset.pattern.permute.xlu0 0
        %1385 = vperm.xlu0 %1384, %v242
        %v1386 = vpop.permute.xlu0 %1385
        %v1388 = vadd.f32 %v1379, %v1386
        %v1389 = vadd.f32 %v1380, %v1386
        %v1390 = vadd.f32 %v1381, %v1386
        %v1391 = vadd.f32 %v1382, %v1386
        %1392 = vst [vmem:[%s230] sm:$0xff] %v1388
        %1393 = vst [vmem:[%s230 + $0x8] sm:$0xff] %v1389
        %1394 = vst [vmem:[%s230 + $0x10] sm:$0xff] %v1390
        %1395 = vst [vmem:[%s230 + $0x18] sm:$0xff] %v1391
        %v1396 = vld [vmem:[%s239 + $0x4] sm:$0xf]
        %v1397 = vld [vmem:[%s2] sm:$0xff]
        %v1399 = vsel %vm245, %v1397, 0
        %v1402 = vsel %vm249, %v1396, 0
        %1404 = vmatprep.subr.mxu0 0.0
        %1405 = vmatpush1.msra.mxu0 %v1402
        %1406 = vmatprep.subr.mxu0 0.0
        %1407 = vmatpush1.msra.mxu0 0.0
        %1408 = vmatprep.subr.mxu0 0.0
        %1409 = vmatpush1.msra.mxu0 0.0
        %1410 = vmatprep.subr.mxu0 0.0
        %1411 = vmatpush1.msra.mxu0 0.0
        %1412 = vmatprep.subr.mxu0 0.0
        %1413 = vmatpush1.msra.mxu0 0.0
        %1414 = vmatprep.subr.mxu0 0.0
        %1415 = vmatpush1.msra.mxu0 0.0
        %1416 = vmatprep.subr.mxu0 0.0
        %1417 = vmatpush1.msra.mxu0 0.0
        %1418 = vmatprep.subr.mxu0 0.0
        %1419 = vmatpush1.msra.mxu0 0.0
        %1420 = vmatprep.subr.mxu0 0.0
        %1421 = vmatpush1.msra.mxu0 0.0
        %1422 = vmatprep.subr.mxu0 0.0
        %1423 = vmatpush1.msra.mxu0 0.0
        %1424 = vmatprep.subr.mxu0 0.0
        %1425 = vmatpush1.msra.mxu0 0.0
        %1426 = vmatprep.subr.mxu0 0.0
        %1427 = vmatpush1.msra.mxu0 0.0
        %1428 = vmatprep.subr.mxu0 0.0
        %1429 = vmatpush1.msra.mxu0 0.0
        %1430 = vmatprep.subr.mxu0 0.0
        %1431 = vmatpush1.msra.mxu0 0.0
        %1432 = vmatprep.subr.mxu0 0.0
        %1433 = vmatpush1.msra.mxu0 0.0
        %1434 = vmatprep.subr.mxu0 0.0
        %1435 = vmatpush1.msra.mxu0 0.0
        %1436 = vmatprep.subr.mxu0 0.0
        %1437 = vmatpush1.msra.mxu0 0.0
        %1438 = vmatprep.subr.mxu0 0.0
        %1439 = vmatpush1.msra.mxu0 0.0
        %1440 = vmatprep.subr.mxu0 0.0
        %1441 = vmatpush1.msra.mxu0 0.0
        %1442 = vmatprep.subr.mxu0 0.0
        %1443 = vmatpush1.msra.mxu0 0.0
        %1444 = vmatprep.subr.mxu0 0.0
        %1445 = vmatpush1.msra.mxu0 0.0
        %1446 = vmatprep.subr.mxu0 0.0
        %1447 = vmatpush1.msra.mxu0 0.0
        %1448 = vmatprep.subr.mxu0 0.0
        %1449 = vmatpush1.msra.mxu0 0.0
        %1450 = vmatprep.subr.mxu0 0.0
        %1451 = vmatpush1.msra.mxu0 0.0
        %1452 = vmatprep.subr.mxu0 0.0
        %1453 = vmatpush1.msra.mxu0 0.0
        %1454 = vmatprep.subr.mxu0 0.0
        %1455 = vmatpush1.msra.mxu0 0.0
        %1456 = vmatprep.subr.mxu0 0.0
        %1457 = vmatpush1.msra.mxu0 0.0
        %1458 = vmatprep.subr.mxu0 0.0
        %1459 = vmatpush1.msra.mxu0 0.0
        %1460 = vmatprep.subr.mxu0 0.0
        %1461 = vmatpush1.msra.mxu0 0.0
        %1462 = vmatprep.subr.mxu0 0.0
        %1463 = vmatpush1.msra.mxu0 0.0
        %1464 = vmatprep.subr.mxu0 0.0
        %1465 = vmatpush1.msra.mxu0 0.0
        %1466 = vmatprep.subr.mxu0 0.0
        %1467 = vmatpush1.msra.mxu0 0.0
        %1468 = vmatprep.mubr.f32.mxu0 0.0
        %1469 = vmatmul.mubr.f32.gmra.mrb[0].mxu0 %v1399
        %v1470 = vpop.f32.mrb[0].mxu0
        %v1471 = vadd.f32 0.0, %v1470
        %v1472 = vpop.f32.mrb[0].mxu0
        %1473 = vdwg.mxu0
        %v1474 = vld [vmem:[#allocation2] sm:$0xff]
        %v1475 = vld [vmem:[#allocation2 + $0x8] sm:$0xff]
        %v1476 = vld [vmem:[#allocation2 + $0x10] sm:$0xff]
        %v1477 = vld [vmem:[#allocation2 + $0x18] sm:$0xff]
        %v1478 = vld [vmem:[#allocation2 + $0x20] sm:$0xff]
        %v1479 = vld [vmem:[#allocation2 + $0x28] sm:$0xff]
        %v1480 = vld [vmem:[#allocation2 + $0x30] sm:$0xff]
        %v1481 = vld [vmem:[#allocation2 + $0x38] sm:$0xff]
        %v1482 = vld [vmem:[#allocation2 + $0x40] sm:$0xff]
        %v1483 = vld [vmem:[#allocation2 + $0x48] sm:$0xff]
        %v1484 = vld [vmem:[#allocation2 + $0x50] sm:$0xff]
        %v1485 = vld [vmem:[#allocation2 + $0x58] sm:$0xff]
        %v1486 = vld [vmem:[#allocation2 + $0x60] sm:$0xff]
        %v1487 = vld [vmem:[#allocation2 + $0x68] sm:$0xff]
        %v1488 = vld [vmem:[#allocation2 + $0x70] sm:$0xff]
        %v1489 = vld [vmem:[#allocation2 + $0x78] sm:$0xff]
        %v1490 = vld [vmem:[#allocation2 + $0x80] sm:$0xff]
        %v1491 = vld [vmem:[#allocation2 + $0x88] sm:$0xff]
        %v1492 = vld [vmem:[#allocation2 + $0x90] sm:$0xff]
        %v1493 = vld [vmem:[#allocation2 + $0x98] sm:$0xff]
        %v1494 = vld [vmem:[#allocation2 + $0xa0] sm:$0xff]
        %v1495 = vld [vmem:[#allocation2 + $0xa8] sm:$0xff]
        %v1496 = vld [vmem:[#allocation2 + $0xb0] sm:$0xff]
        %v1497 = vld [vmem:[#allocation2 + $0xb8] sm:$0xff]
        %v1498 = vld [vmem:[#allocation2 + $0xc0] sm:$0xff]
        %v1499 = vld [vmem:[#allocation2 + $0xc8] sm:$0xff]
        %v1500 = vld [vmem:[#allocation2 + $0xd0] sm:$0xff]
        %v1501 = vld [vmem:[#allocation2 + $0xd8] sm:$0xff]
        %v1502 = vld [vmem:[#allocation2 + $0xe0] sm:$0xff]
        %v1503 = vld [vmem:[#allocation2 + $0xe8] sm:$0xff]
        %v1504 = vld [vmem:[#allocation2 + $0xf0] sm:$0xff]
        %v1505 = vld [vmem:[#allocation2 + $0xf8] sm:$0xff]
        %v1506 = vld [vmem:[#allocation2 + $0x100] sm:$0xff]
        %v1507 = vld [vmem:[#allocation2 + $0x108] sm:$0xff]
        %v1508 = vld [vmem:[#allocation2 + $0x110] sm:$0xff]
        %v1509 = vld [vmem:[#allocation2 + $0x118] sm:$0xff]
        %v1510 = vld [vmem:[#allocation2 + $0x120] sm:$0xff]
        %v1511 = vld [vmem:[#allocation2 + $0x128] sm:$0xff]
        %v1512 = vld [vmem:[#allocation2 + $0x130] sm:$0xff]
        %v1513 = vld [vmem:[#allocation2 + $0x138] sm:$0xff]
        %v1514 = vld [vmem:[#allocation2 + $0x140] sm:$0xff]
        %v1515 = vld [vmem:[#allocation2 + $0x148] sm:$0xff]
        %v1516 = vld [vmem:[#allocation2 + $0x150] sm:$0xff]
        %v1517 = vld [vmem:[#allocation2 + $0x158] sm:$0xff]
        %v1518 = vld [vmem:[#allocation2 + $0x160] sm:$0xff]
        %v1519 = vld [vmem:[#allocation2 + $0x168] sm:$0xff]
        %v1520 = vld [vmem:[#allocation2 + $0x170] sm:$0xff]
        %v1521 = vld [vmem:[#allocation2 + $0x178] sm:$0xff]
        %v1522 = vld [vmem:[#allocation2 + $0x180] sm:$0xff]
        %v1523 = vld [vmem:[#allocation2 + $0x188] sm:$0xff]
        %v1524 = vld [vmem:[#allocation2 + $0x190] sm:$0xff]
        %v1525 = vld [vmem:[#allocation2 + $0x198] sm:$0xff]
        %v1526 = vld [vmem:[#allocation2 + $0x1a0] sm:$0xff]
        %v1527 = vld [vmem:[#allocation2 + $0x1a8] sm:$0xff]
        %v1528 = vld [vmem:[#allocation2 + $0x1b0] sm:$0xff]
        %v1529 = vld [vmem:[#allocation2 + $0x1b8] sm:$0xff]
        %v1530 = vld [vmem:[#allocation2 + $0x1c0] sm:$0xff]
        %v1531 = vld [vmem:[#allocation2 + $0x1c8] sm:$0xff]
        %v1532 = vld [vmem:[#allocation2 + $0x1d0] sm:$0xff]
        %v1533 = vld [vmem:[#allocation2 + $0x1d8] sm:$0xff]
        %v1534 = vld [vmem:[#allocation2 + $0x1e0] sm:$0xff]
        %v1535 = vld [vmem:[#allocation2 + $0x1e8] sm:$0xff]
        %v1536 = vld [vmem:[#allocation2 + $0x1f0] sm:$0xff]
        %v1537 = vld [vmem:[#allocation2 + $0x1f8] sm:$0xff]
        %v1538 = vld [vmem:[%s387] sm:$0xff]
        %v1540 = vsel %vm245, %v1538, 0
        %1542 = vmatprep.subr.mxu0 0.0
        %1543 = vmatpush1.msra.mxu0 %v1402
        %1544 = vmatprep.subr.mxu0 0.0
        %1545 = vmatpush1.msra.mxu0 0.0
        %1546 = vmatprep.subr.mxu0 0.0
        %1547 = vmatpush1.msra.mxu0 0.0
        %1548 = vmatprep.subr.mxu0 0.0
        %1549 = vmatpush1.msra.mxu0 0.0
        %1550 = vmatprep.subr.mxu0 0.0
        %1551 = vmatpush1.msra.mxu0 0.0
        %1552 = vmatprep.subr.mxu0 0.0
        %1553 = vmatpush1.msra.mxu0 0.0
        %1554 = vmatprep.subr.mxu0 0.0
        %1555 = vmatpush1.msra.mxu0 0.0
        %1556 = vmatprep.subr.mxu0 0.0
        %1557 = vmatpush1.msra.mxu0 0.0
        %1558 = vmatprep.subr.mxu0 0.0
        %1559 = vmatpush1.msra.mxu0 0.0
        %1560 = vmatprep.subr.mxu0 0.0
        %1561 = vmatpush1.msra.mxu0 0.0
        %1562 = vmatprep.subr.mxu0 0.0
        %1563 = vmatpush1.msra.mxu0 0.0
        %1564 = vmatprep.subr.mxu0 0.0
        %1565 = vmatpush1.msra.mxu0 0.0
        %1566 = vmatprep.subr.mxu0 0.0
        %1567 = vmatpush1.msra.mxu0 0.0
        %1568 = vmatprep.subr.mxu0 0.0
        %1569 = vmatpush1.msra.mxu0 0.0
        %1570 = vmatprep.subr.mxu0 0.0
        %1571 = vmatpush1.msra.mxu0 0.0
        %1572 = vmatprep.subr.mxu0 0.0
        %1573 = vmatpush1.msra.mxu0 0.0
        %1574 = vmatprep.subr.mxu0 0.0
        %1575 = vmatpush1.msra.mxu0 0.0
        %1576 = vmatprep.subr.mxu0 0.0
        %1577 = vmatpush1.msra.mxu0 0.0
        %1578 = vmatprep.subr.mxu0 0.0
        %1579 = vmatpush1.msra.mxu0 0.0
        %1580 = vmatprep.subr.mxu0 0.0
        %1581 = vmatpush1.msra.mxu0 0.0
        %1582 = vmatprep.subr.mxu0 0.0
        %1583 = vmatpush1.msra.mxu0 0.0
        %1584 = vmatprep.subr.mxu0 0.0
        %1585 = vmatpush1.msra.mxu0 0.0
        %1586 = vmatprep.subr.mxu0 0.0
        %1587 = vmatpush1.msra.mxu0 0.0
        %1588 = vmatprep.subr.mxu0 0.0
        %1589 = vmatpush1.msra.mxu0 0.0
        %1590 = vmatprep.subr.mxu0 0.0
        %1591 = vmatpush1.msra.mxu0 0.0
        %1592 = vmatprep.subr.mxu0 0.0
        %1593 = vmatpush1.msra.mxu0 0.0
        %1594 = vmatprep.subr.mxu0 0.0
        %1595 = vmatpush1.msra.mxu0 0.0
        %1596 = vmatprep.subr.mxu0 0.0
        %1597 = vmatpush1.msra.mxu0 0.0
        %1598 = vmatprep.subr.mxu0 0.0
        %1599 = vmatpush1.msra.mxu0 0.0
        %1600 = vmatprep.subr.mxu0 0.0
        %1601 = vmatpush1.msra.mxu0 0.0
        %1602 = vmatprep.subr.mxu0 0.0
        %1603 = vmatpush1.msra.mxu0 0.0
        %1604 = vmatprep.subr.mxu0 0.0
        %1605 = vmatpush1.msra.mxu0 0.0
        %1606 = vmatprep.mubr.f32.mxu0 0.0
        %1607 = vmatmul.mubr.f32.gmra.mrb[0].mxu0 %v1540
        %v1608 = vpop.f32.mrb[0].mxu0
        %v1609 = vadd.f32 0.0, %v1608
        %v1610 = vpop.f32.mrb[0].mxu0
        %1611 = vdwg.mxu0
        %v1612 = vld [vmem:[%s462] sm:$0xff]
        %v1613 = vld [vmem:[%s462 + $0x8] sm:$0xff]
        %v1614 = vld [vmem:[%s462 + $0x10] sm:$0xff]
        %v1615 = vld [vmem:[%s462 + $0x18] sm:$0xff]
        %v1616 = vld [vmem:[%s462 + $0x20] sm:$0xff]
        %v1617 = vld [vmem:[%s462 + $0x28] sm:$0xff]
        %v1618 = vld [vmem:[%s462 + $0x30] sm:$0xff]
        %v1619 = vld [vmem:[%s462 + $0x38] sm:$0xff]
        %v1620 = vld [vmem:[%s462 + $0x40] sm:$0xff]
        %v1621 = vld [vmem:[%s462 + $0x48] sm:$0xff]
        %v1622 = vld [vmem:[%s462 + $0x50] sm:$0xff]
        %v1623 = vld [vmem:[%s462 + $0x58] sm:$0xff]
        %v1624 = vld [vmem:[%s462 + $0x60] sm:$0xff]
        %v1625 = vld [vmem:[%s462 + $0x68] sm:$0xff]
        %v1626 = vld [vmem:[%s462 + $0x70] sm:$0xff]
        %v1627 = vld [vmem:[%s462 + $0x78] sm:$0xff]
        %v1628 = vld [vmem:[%s462 + $0x80] sm:$0xff]
        %v1629 = vld [vmem:[%s462 + $0x88] sm:$0xff]
        %v1630 = vld [vmem:[%s462 + $0x90] sm:$0xff]
        %v1631 = vld [vmem:[%s462 + $0x98] sm:$0xff]
        %v1632 = vld [vmem:[%s462 + $0xa0] sm:$0xff]
        %v1633 = vld [vmem:[%s462 + $0xa8] sm:$0xff]
        %v1634 = vld [vmem:[%s462 + $0xb0] sm:$0xff]
        %v1635 = vld [vmem:[%s462 + $0xb8] sm:$0xff]
        %v1636 = vld [vmem:[%s462 + $0xc0] sm:$0xff]
        %v1637 = vld [vmem:[%s462 + $0xc8] sm:$0xff]
        %v1638 = vld [vmem:[%s462 + $0xd0] sm:$0xff]
        %v1639 = vld [vmem:[%s462 + $0xd8] sm:$0xff]
        %v1640 = vld [vmem:[%s462 + $0xe0] sm:$0xff]
        %v1641 = vld [vmem:[%s462 + $0xe8] sm:$0xff]
        %v1642 = vld [vmem:[%s462 + $0xf0] sm:$0xff]
        %v1643 = vld [vmem:[%s462 + $0xf8] sm:$0xff]
        %v1644 = vld [vmem:[%s462 + $0x100] sm:$0xff]
        %v1645 = vld [vmem:[%s462 + $0x108] sm:$0xff]
        %v1646 = vld [vmem:[%s462 + $0x110] sm:$0xff]
        %v1647 = vld [vmem:[%s462 + $0x118] sm:$0xff]
        %v1648 = vld [vmem:[%s462 + $0x120] sm:$0xff]
        %v1649 = vld [vmem:[%s462 + $0x128] sm:$0xff]
        %v1650 = vld [vmem:[%s462 + $0x130] sm:$0xff]
        %v1651 = vld [vmem:[%s462 + $0x138] sm:$0xff]
        %v1652 = vld [vmem:[%s462 + $0x140] sm:$0xff]
        %v1653 = vld [vmem:[%s462 + $0x148] sm:$0xff]
        %v1654 = vld [vmem:[%s462 + $0x150] sm:$0xff]
        %v1655 = vld [vmem:[%s462 + $0x158] sm:$0xff]
        %v1656 = vld [vmem:[%s462 + $0x160] sm:$0xff]
        %v1657 = vld [vmem:[%s462 + $0x168] sm:$0xff]
        %v1658 = vld [vmem:[%s462 + $0x170] sm:$0xff]
        %v1659 = vld [vmem:[%s462 + $0x178] sm:$0xff]
        %v1660 = vld [vmem:[%s462 + $0x180] sm:$0xff]
        %v1661 = vld [vmem:[%s462 + $0x188] sm:$0xff]
        %v1662 = vld [vmem:[%s462 + $0x190] sm:$0xff]
        %v1663 = vld [vmem:[%s462 + $0x198] sm:$0xff]
        %v1664 = vld [vmem:[%s462 + $0x1a0] sm:$0xff]
        %v1665 = vld [vmem:[%s462 + $0x1a8] sm:$0xff]
        %v1666 = vld [vmem:[%s462 + $0x1b0] sm:$0xff]
        %v1667 = vld [vmem:[%s462 + $0x1b8] sm:$0xff]
        %v1668 = vld [vmem:[%s462 + $0x1c0] sm:$0xff]
        %v1669 = vld [vmem:[%s462 + $0x1c8] sm:$0xff]
        %v1670 = vld [vmem:[%s462 + $0x1d0] sm:$0xff]
        %v1671 = vld [vmem:[%s462 + $0x1d8] sm:$0xff]
        %v1672 = vld [vmem:[%s462 + $0x1e0] sm:$0xff]
        %v1673 = vld [vmem:[%s462 + $0x1e8] sm:$0xff]
        %v1674 = vld [vmem:[%s462 + $0x1f0] sm:$0xff]
        %v1675 = vld [vmem:[%s462 + $0x1f8] sm:$0xff]
        %1676 = vmatprep.subr.mxu0 %v1613
        %1677 = vmatpush1.msra.mxu0 %v1612
        %1678 = vmatprep.subr.mxu0 %v1617
        %1679 = vmatpush1.msra.mxu0 %v1616
        %1680 = vmatprep.subr.mxu0 %v1621
        %1681 = vmatpush1.msra.mxu0 %v1620
        %1682 = vmatprep.subr.mxu0 %v1625
        %1683 = vmatpush1.msra.mxu0 %v1624
        %1684 = vmatprep.subr.mxu0 %v1629
        %1685 = vmatpush1.msra.mxu0 %v1628
        %1686 = vmatprep.subr.mxu0 %v1633
        %1687 = vmatpush1.msra.mxu0 %v1632
        %1688 = vmatprep.subr.mxu0 %v1637
        %1689 = vmatpush1.msra.mxu0 %v1636
        %1690 = vmatprep.subr.mxu0 %v1641
        %1691 = vmatpush1.msra.mxu0 %v1640
        %1692 = vmatprep.subr.mxu0 %v1645
        %1693 = vmatpush1.msra.mxu0 %v1644
        %1694 = vmatprep.subr.mxu0 %v1649
        %1695 = vmatpush1.msra.mxu0 %v1648
        %1696 = vmatprep.subr.mxu0 %v1653
        %1697 = vmatpush1.msra.mxu0 %v1652
        %1698 = vmatprep.subr.mxu0 %v1657
        %1699 = vmatpush1.msra.mxu0 %v1656
        %1700 = vmatprep.subr.mxu0 %v1661
        %1701 = vmatpush1.msra.mxu0 %v1660
        %1702 = vmatprep.subr.mxu0 %v1665
        %1703 = vmatpush1.msra.mxu0 %v1664
        %1704 = vmatprep.subr.mxu0 %v1669
        %1705 = vmatpush1.msra.mxu0 %v1668
        %1706 = vmatprep.subr.mxu0 %v1673
        %1707 = vmatpush1.msra.mxu0 %v1672
        %1708 = vmatprep.subr.mxu0 0.0
        %1709 = vmatpush1.msra.mxu0 0.0
        %1710 = vmatprep.subr.mxu0 0.0
        %1711 = vmatpush1.msra.mxu0 0.0
        %1712 = vmatprep.subr.mxu0 0.0
        %1713 = vmatpush1.msra.mxu0 0.0
        %1714 = vmatprep.subr.mxu0 0.0
        %1715 = vmatpush1.msra.mxu0 0.0
        %1716 = vmatprep.subr.mxu0 0.0
        %1717 = vmatpush1.msra.mxu0 0.0
        %1718 = vmatprep.subr.mxu0 0.0
        %1719 = vmatpush1.msra.mxu0 0.0
        %1720 = vmatprep.subr.mxu0 0.0
        %1721 = vmatpush1.msra.mxu0 0.0
        %1722 = vmatprep.subr.mxu0 0.0
        %1723 = vmatpush1.msra.mxu0 0.0
        %1724 = vmatprep.subr.mxu0 0.0
        %1725 = vmatpush1.msra.mxu0 0.0
        %1726 = vmatprep.subr.mxu0 0.0
        %1727 = vmatpush1.msra.mxu0 0.0
        %1728 = vmatprep.subr.mxu0 0.0
        %1729 = vmatpush1.msra.mxu0 0.0
        %1730 = vmatprep.subr.mxu0 0.0
        %1731 = vmatpush1.msra.mxu0 0.0
        %1732 = vmatprep.subr.mxu0 0.0
        %1733 = vmatpush1.msra.mxu0 0.0
        %1734 = vmatprep.subr.mxu0 0.0
        %1735 = vmatpush1.msra.mxu0 0.0
        %1736 = vmatprep.subr.mxu0 0.0
        %1737 = vmatpush1.msra.mxu0 0.0
        %1738 = vmatprep.subr.mxu0 0.0
        %1739 = vmatpush1.msra.mxu0 0.0
        %1740 = vmatprep.mubr.f32.mxu0 0.0
        %1741 = vmatmul.mubr.f32.gmra.mrb[0].mxu0 %v1609
        %v1742 = vpop.f32.mrb[0].mxu0
        %v1743 = vadd.f32 0.0, %v1742
        %v1744 = vpop.f32.mrb[0].mxu0
        %v1745 = vadd.f32 0.0, %v1744
        %1746 = vdwg.mxu0
        %1747 = vmatprep.subr.mxu0 %v1615
        %1748 = vmatpush1.msra.mxu0 %v1614
        %1749 = vmatprep.subr.mxu0 %v1619
        %1750 = vmatpush1.msra.mxu0 %v1618
        %1751 = vmatprep.subr.mxu0 %v1623
        %1752 = vmatpush1.msra.mxu0 %v1622
        %1753 = vmatprep.subr.mxu0 %v1627
        %1754 = vmatpush1.msra.mxu0 %v1626
        %1755 = vmatprep.subr.mxu0 %v1631
        %1756 = vmatpush1.msra.mxu0 %v1630
        %1757 = vmatprep.subr.mxu0 %v1635
        %1758 = vmatpush1.msra.mxu0 %v1634
        %1759 = vmatprep.subr.mxu0 %v1639
        %1760 = vmatpush1.msra.mxu0 %v1638
        %1761 = vmatprep.subr.mxu0 %v1643
        %1762 = vmatpush1.msra.mxu0 %v1642
        %1763 = vmatprep.subr.mxu0 %v1647
        %1764 = vmatpush1.msra.mxu0 %v1646
        %1765 = vmatprep.subr.mxu0 %v1651
        %1766 = vmatpush1.msra.mxu0 %v1650
        %1767 = vmatprep.subr.mxu0 %v1655
        %1768 = vmatpush1.msra.mxu0 %v1654
        %1769 = vmatprep.subr.mxu0 %v1659
        %1770 = vmatpush1.msra.mxu0 %v1658
        %1771 = vmatprep.subr.mxu0 %v1663
        %1772 = vmatpush1.msra.mxu0 %v1662
        %1773 = vmatprep.subr.mxu0 %v1667
        %1774 = vmatpush1.msra.mxu0 %v1666
        %1775 = vmatprep.subr.mxu0 %v1671
        %1776 = vmatpush1.msra.mxu0 %v1670
        %1777 = vmatprep.subr.mxu0 %v1675
        %1778 = vmatpush1.msra.mxu0 %v1674
        %1779 = vmatprep.subr.mxu0 0.0
        %1780 = vmatpush1.msra.mxu0 0.0
        %1781 = vmatprep.subr.mxu0 0.0
        %1782 = vmatpush1.msra.mxu0 0.0
        %1783 = vmatprep.subr.mxu0 0.0
        %1784 = vmatpush1.msra.mxu0 0.0
        %1785 = vmatprep.subr.mxu0 0.0
        %1786 = vmatpush1.msra.mxu0 0.0
        %1787 = vmatprep.subr.mxu0 0.0
        %1788 = vmatpush1.msra.mxu0 0.0
        %1789 = vmatprep.subr.mxu0 0.0
        %1790 = vmatpush1.msra.mxu0 0.0
        %1791 = vmatprep.subr.mxu0 0.0
        %1792 = vmatpush1.msra.mxu0 0.0
        %1793 = vmatprep.subr.mxu0 0.0
        %1794 = vmatpush1.msra.mxu0 0.0
        %1795 = vmatprep.subr.mxu0 0.0
        %1796 = vmatpush1.msra.mxu0 0.0
        %1797 = vmatprep.subr.mxu0 0.0
        %1798 = vmatpush1.msra.mxu0 0.0
        %1799 = vmatprep.subr.mxu0 0.0
        %1800 = vmatpush1.msra.mxu0 0.0
        %1801 = vmatprep.subr.mxu0 0.0
        %1802 = vmatpush1.msra.mxu0 0.0
        %1803 = vmatprep.subr.mxu0 0.0
        %1804 = vmatpush1.msra.mxu0 0.0
        %1805 = vmatprep.subr.mxu0 0.0
        %1806 = vmatpush1.msra.mxu0 0.0
        %1807 = vmatprep.subr.mxu0 0.0
        %1808 = vmatpush1.msra.mxu0 0.0
        %1809 = vmatprep.subr.mxu0 0.0
        %1810 = vmatpush1.msra.mxu0 0.0
        %1811 = vmatprep.mubr.f32.mxu0 0.0
        %1812 = vmatmul.mubr.f32.gmra.mrb[0].mxu0 %v1609
        %v1813 = vpop.f32.mrb[0].mxu0
        %v1814 = vadd.f32 0.0, %v1813
        %v1815 = vpop.f32.mrb[0].mxu0
        %v1816 = vadd.f32 0.0, %v1815
        %1817 = vdwg.mxu0
        %1818 = vmatprep.subr.mxu0 %v1475
        %1819 = vmatpush1.msra.mxu0 %v1474
        %1820 = vmatprep.subr.mxu0 %v1479
        %1821 = vmatpush1.msra.mxu0 %v1478
        %1822 = vmatprep.subr.mxu0 %v1483
        %1823 = vmatpush1.msra.mxu0 %v1482
        %1824 = vmatprep.subr.mxu0 %v1487
        %1825 = vmatpush1.msra.mxu0 %v1486
        %1826 = vmatprep.subr.mxu0 %v1491
        %1827 = vmatpush1.msra.mxu0 %v1490
        %1828 = vmatprep.subr.mxu0 %v1495
        %1829 = vmatpush1.msra.mxu0 %v1494
        %1830 = vmatprep.subr.mxu0 %v1499
        %1831 = vmatpush1.msra.mxu0 %v1498
        %1832 = vmatprep.subr.mxu0 %v1503
        %1833 = vmatpush1.msra.mxu0 %v1502
        %1834 = vmatprep.subr.mxu0 %v1507
        %1835 = vmatpush1.msra.mxu0 %v1506
        %1836 = vmatprep.subr.mxu0 %v1511
        %1837 = vmatpush1.msra.mxu0 %v1510
        %1838 = vmatprep.subr.mxu0 %v1515
        %1839 = vmatpush1.msra.mxu0 %v1514
        %1840 = vmatprep.subr.mxu0 %v1519
        %1841 = vmatpush1.msra.mxu0 %v1518
        %1842 = vmatprep.subr.mxu0 %v1523
        %1843 = vmatpush1.msra.mxu0 %v1522
        %1844 = vmatprep.subr.mxu0 %v1527
        %1845 = vmatpush1.msra.mxu0 %v1526
        %1846 = vmatprep.subr.mxu0 %v1531
        %1847 = vmatpush1.msra.mxu0 %v1530
        %1848 = vmatprep.subr.mxu0 %v1535
        %1849 = vmatpush1.msra.mxu0 %v1534
        %1850 = vmatprep.subr.mxu0 0.0
        %1851 = vmatpush1.msra.mxu0 0.0
        %1852 = vmatprep.subr.mxu0 0.0
        %1853 = vmatpush1.msra.mxu0 0.0
        %1854 = vmatprep.subr.mxu0 0.0
        %1855 = vmatpush1.msra.mxu0 0.0
        %1856 = vmatprep.subr.mxu0 0.0
        %1857 = vmatpush1.msra.mxu0 0.0
        %1858 = vmatprep.subr.mxu0 0.0
        %1859 = vmatpush1.msra.mxu0 0.0
        %1860 = vmatprep.subr.mxu0 0.0
        %1861 = vmatpush1.msra.mxu0 0.0
        %1862 = vmatprep.subr.mxu0 0.0
        %1863 = vmatpush1.msra.mxu0 0.0
        %1864 = vmatprep.subr.mxu0 0.0
        %1865 = vmatpush1.msra.mxu0 0.0
        %1866 = vmatprep.subr.mxu0 0.0
        %1867 = vmatpush1.msra.mxu0 0.0
        %1868 = vmatprep.subr.mxu0 0.0
        %1869 = vmatpush1.msra.mxu0 0.0
        %1870 = vmatprep.subr.mxu0 0.0
        %1871 = vmatpush1.msra.mxu0 0.0
        %1872 = vmatprep.subr.mxu0 0.0
        %1873 = vmatpush1.msra.mxu0 0.0
        %1874 = vmatprep.subr.mxu0 0.0
        %1875 = vmatpush1.msra.mxu0 0.0
        %1876 = vmatprep.subr.mxu0 0.0
        %1877 = vmatpush1.msra.mxu0 0.0
        %1878 = vmatprep.subr.mxu0 0.0
        %1879 = vmatpush1.msra.mxu0 0.0
        %1880 = vmatprep.subr.mxu0 0.0
        %1881 = vmatpush1.msra.mxu0 0.0
        %1882 = vmatprep.mubr.f32.mxu0 0.0
        %1883 = vmatmul.mubr.f32.gmra.mrb[0].mxu0 %v1471
        %v1884 = vpop.f32.mrb[0].mxu0
        %v1885 = vadd.f32 %v1743, %v1884
        %v1886 = vpop.f32.mrb[0].mxu0
        %v1887 = vadd.f32 %v1745, %v1886
        %1888 = vdwg.mxu0
        %1889 = vmatprep.subr.mxu0 %v1477
        %1890 = vmatpush1.msra.mxu0 %v1476
        %1891 = vmatprep.subr.mxu0 %v1481
        %1892 = vmatpush1.msra.mxu0 %v1480
        %1893 = vmatprep.subr.mxu0 %v1485
        %1894 = vmatpush1.msra.mxu0 %v1484
        %1895 = vmatprep.subr.mxu0 %v1489
        %1896 = vmatpush1.msra.mxu0 %v1488
        %1897 = vmatprep.subr.mxu0 %v1493
        %1898 = vmatpush1.msra.mxu0 %v1492
        %1899 = vmatprep.subr.mxu0 %v1497
        %1900 = vmatpush1.msra.mxu0 %v1496
        %1901 = vmatprep.subr.mxu0 %v1501
        %1902 = vmatpush1.msra.mxu0 %v1500
        %1903 = vmatprep.subr.mxu0 %v1505
        %1904 = vmatpush1.msra.mxu0 %v1504
        %1905 = vmatprep.subr.mxu0 %v1509
        %1906 = vmatpush1.msra.mxu0 %v1508
        %1907 = vmatprep.subr.mxu0 %v1513
        %1908 = vmatpush1.msra.mxu0 %v1512
        %1909 = vmatprep.subr.mxu0 %v1517
        %1910 = vmatpush1.msra.mxu0 %v1516
        %1911 = vmatprep.subr.mxu0 %v1521
        %1912 = vmatpush1.msra.mxu0 %v1520
        %1913 = vmatprep.subr.mxu0 %v1525
        %1914 = vmatpush1.msra.mxu0 %v1524
        %1915 = vmatprep.subr.mxu0 %v1529
        %1916 = vmatpush1.msra.mxu0 %v1528
        %1917 = vmatprep.subr.mxu0 %v1533
        %1918 = vmatpush1.msra.mxu0 %v1532
        %1919 = vmatprep.subr.mxu0 %v1537
        %1920 = vmatpush1.msra.mxu0 %v1536
        %1921 = vmatprep.subr.mxu0 0.0
        %1922 = vmatpush1.msra.mxu0 0.0
        %1923 = vmatprep.subr.mxu0 0.0
        %1924 = vmatpush1.msra.mxu0 0.0
        %1925 = vmatprep.subr.mxu0 0.0
        %1926 = vmatpush1.msra.mxu0 0.0
        %1927 = vmatprep.subr.mxu0 0.0
        %1928 = vmatpush1.msra.mxu0 0.0
        %1929 = vmatprep.subr.mxu0 0.0
        %1930 = vmatpush1.msra.mxu0 0.0
        %1931 = vmatprep.subr.mxu0 0.0
        %1932 = vmatpush1.msra.mxu0 0.0
        %1933 = vmatprep.subr.mxu0 0.0
        %1934 = vmatpush1.msra.mxu0 0.0
        %1935 = vmatprep.subr.mxu0 0.0
        %1936 = vmatpush1.msra.mxu0 0.0
        %1937 = vmatprep.subr.mxu0 0.0
        %1938 = vmatpush1.msra.mxu0 0.0
        %1939 = vmatprep.subr.mxu0 0.0
        %1940 = vmatpush1.msra.mxu0 0.0
        %1941 = vmatprep.subr.mxu0 0.0
        %1942 = vmatpush1.msra.mxu0 0.0
        %1943 = vmatprep.subr.mxu0 0.0
        %1944 = vmatpush1.msra.mxu0 0.0
        %1945 = vmatprep.subr.mxu0 0.0
        %1946 = vmatpush1.msra.mxu0 0.0
        %1947 = vmatprep.subr.mxu0 0.0
        %1948 = vmatpush1.msra.mxu0 0.0
        %1949 = vmatprep.subr.mxu0 0.0
        %1950 = vmatpush1.msra.mxu0 0.0
        %1951 = vmatprep.subr.mxu0 0.0
        %1952 = vmatpush1.msra.mxu0 0.0
        %1953 = vmatprep.mubr.f32.mxu0 0.0
        %1954 = vmatmul.mubr.f32.gmra.mrb[0].mxu0 %v1471
        %v1955 = vpop.f32.mrb[0].mxu0
        %v1956 = vadd.f32 %v1814, %v1955
        %v1957 = vpop.f32.mrb[0].mxu0
        %v1958 = vadd.f32 %v1816, %v1957
        %1959 = vdwg.mxu0
        %v1960 = vld [vmem:[%s811] sm:$0xff]
        %v1962 = vsel %vm245, %v1960, 0
        %1964 = vmatprep.subr.mxu0 0.0
        %1965 = vmatpush1.msra.mxu0 %v1402
        %1966 = vmatprep.subr.mxu0 0.0
        %1967 = vmatpush1.msra.mxu0 0.0
        %1968 = vmatprep.subr.mxu0 0.0
        %1969 = vmatpush1.msra.mxu0 0.0
        %1970 = vmatprep.subr.mxu0 0.0
        %1971 = vmatpush1.msra.mxu0 0.0
        %1972 = vmatprep.subr.mxu0 0.0
        %1973 = vmatpush1.msra.mxu0 0.0
        %1974 = vmatprep.subr.mxu0 0.0
        %1975 = vmatpush1.msra.mxu0 0.0
        %1976 = vmatprep.subr.mxu0 0.0
        %1977 = vmatpush1.msra.mxu0 0.0
        %1978 = vmatprep.subr.mxu0 0.0
        %1979 = vmatpush1.msra.mxu0 0.0
        %1980 = vmatprep.subr.mxu0 0.0
        %1981 = vmatpush1.msra.mxu0 0.0
        %1982 = vmatprep.subr.mxu0 0.0
        %1983 = vmatpush1.msra.mxu0 0.0
        %1984 = vmatprep.subr.mxu0 0.0
        %1985 = vmatpush1.msra.mxu0 0.0
        %1986 = vmatprep.subr.mxu0 0.0
        %1987 = vmatpush1.msra.mxu0 0.0
        %1988 = vmatprep.subr.mxu0 0.0
        %1989 = vmatpush1.msra.mxu0 0.0
        %1990 = vmatprep.subr.mxu0 0.0
        %1991 = vmatpush1.msra.mxu0 0.0
        %1992 = vmatprep.subr.mxu0 0.0
        %1993 = vmatpush1.msra.mxu0 0.0
        %1994 = vmatprep.subr.mxu0 0.0
        %1995 = vmatpush1.msra.mxu0 0.0
        %1996 = vmatprep.subr.mxu0 0.0
        %1997 = vmatpush1.msra.mxu0 0.0
        %1998 = vmatprep.subr.mxu0 0.0
        %1999 = vmatpush1.msra.mxu0 0.0
        %2000 = vmatprep.subr.mxu0 0.0
        %2001 = vmatpush1.msra.mxu0 0.0
        %2002 = vmatprep.subr.mxu0 0.0
        %2003 = vmatpush1.msra.mxu0 0.0
        %2004 = vmatprep.subr.mxu0 0.0
        %2005 = vmatpush1.msra.mxu0 0.0
        %2006 = vmatprep.subr.mxu0 0.0
        %2007 = vmatpush1.msra.mxu0 0.0
        %2008 = vmatprep.subr.mxu0 0.0
        %2009 = vmatpush1.msra.mxu0 0.0
        %2010 = vmatprep.subr.mxu0 0.0
        %2011 = vmatpush1.msra.mxu0 0.0
        %2012 = vmatprep.subr.mxu0 0.0
        %2013 = vmatpush1.msra.mxu0 0.0
        %2014 = vmatprep.subr.mxu0 0.0
        %2015 = vmatpush1.msra.mxu0 0.0
        %2016 = vmatprep.subr.mxu0 0.0
        %2017 = vmatpush1.msra.mxu0 0.0
        %2018 = vmatprep.subr.mxu0 0.0
        %2019 = vmatpush1.msra.mxu0 0.0
        %2020 = vmatprep.subr.mxu0 0.0
        %2021 = vmatpush1.msra.mxu0 0.0
        %2022 = vmatprep.subr.mxu0 0.0
        %2023 = vmatpush1.msra.mxu0 0.0
        %2024 = vmatprep.subr.mxu0 0.0
        %2025 = vmatpush1.msra.mxu0 0.0
        %2026 = vmatprep.subr.mxu0 0.0
        %2027 = vmatpush1.msra.mxu0 0.0
        %2028 = vmatprep.mubr.f32.mxu0 0.0
        %2029 = vmatmul.mubr.f32.gmra.mrb[0].mxu0 %v1962
        %v2030 = vpop.f32.mrb[0].mxu0
        %v2031 = vadd.f32 0.0, %v2030
        %v2032 = vpop.f32.mrb[0].mxu0
        %2033 = vdwg.mxu0
        %v2034 = vld [vmem:[%s886] sm:$0xff]
        %v2035 = vld [vmem:[%s886 + $0x8] sm:$0xff]
        %v2036 = vld [vmem:[%s886 + $0x10] sm:$0xff]
        %v2037 = vld [vmem:[%s886 + $0x18] sm:$0xff]
        %v2038 = vld [vmem:[%s886 + $0x20] sm:$0xff]
        %v2039 = vld [vmem:[%s886 + $0x28] sm:$0xff]
        %v2040 = vld [vmem:[%s886 + $0x30] sm:$0xff]
        %v2041 = vld [vmem:[%s886 + $0x38] sm:$0xff]
        %v2042 = vld [vmem:[%s886 + $0x40] sm:$0xff]
        %v2043 = vld [vmem:[%s886 + $0x48] sm:$0xff]
        %v2044 = vld [vmem:[%s886 + $0x50] sm:$0xff]
        %v2045 = vld [vmem:[%s886 + $0x58] sm:$0xff]
        %v2046 = vld [vmem:[%s886 + $0x60] sm:$0xff]
        %v2047 = vld [vmem:[%s886 + $0x68] sm:$0xff]
        %v2048 = vld [vmem:[%s886 + $0x70] sm:$0xff]
        %v2049 = vld [vmem:[%s886 + $0x78] sm:$0xff]
        %v2050 = vld [vmem:[%s886 + $0x80] sm:$0xff]
        %v2051 = vld [vmem:[%s886 + $0x88] sm:$0xff]
        %v2052 = vld [vmem:[%s886 + $0x90] sm:$0xff]
        %v2053 = vld [vmem:[%s886 + $0x98] sm:$0xff]
        %v2054 = vld [vmem:[%s886 + $0xa0] sm:$0xff]
        %v2055 = vld [vmem:[%s886 + $0xa8] sm:$0xff]
        %v2056 = vld [vmem:[%s886 + $0xb0] sm:$0xff]
        %v2057 = vld [vmem:[%s886 + $0xb8] sm:$0xff]
        %v2058 = vld [vmem:[%s886 + $0xc0] sm:$0xff]
        %v2059 = vld [vmem:[%s886 + $0xc8] sm:$0xff]
        %v2060 = vld [vmem:[%s886 + $0xd0] sm:$0xff]
        %v2061 = vld [vmem:[%s886 + $0xd8] sm:$0xff]
        %v2062 = vld [vmem:[%s886 + $0xe0] sm:$0xff]
        %v2063 = vld [vmem:[%s886 + $0xe8] sm:$0xff]
        %v2064 = vld [vmem:[%s886 + $0xf0] sm:$0xff]
        %v2065 = vld [vmem:[%s886 + $0xf8] sm:$0xff]
        %v2066 = vld [vmem:[%s886 + $0x100] sm:$0xff]
        %v2067 = vld [vmem:[%s886 + $0x108] sm:$0xff]
        %v2068 = vld [vmem:[%s886 + $0x110] sm:$0xff]
        %v2069 = vld [vmem:[%s886 + $0x118] sm:$0xff]
        %v2070 = vld [vmem:[%s886 + $0x120] sm:$0xff]
        %v2071 = vld [vmem:[%s886 + $0x128] sm:$0xff]
        %v2072 = vld [vmem:[%s886 + $0x130] sm:$0xff]
        %v2073 = vld [vmem:[%s886 + $0x138] sm:$0xff]
        %v2074 = vld [vmem:[%s886 + $0x140] sm:$0xff]
        %v2075 = vld [vmem:[%s886 + $0x148] sm:$0xff]
        %v2076 = vld [vmem:[%s886 + $0x150] sm:$0xff]
        %v2077 = vld [vmem:[%s886 + $0x158] sm:$0xff]
        %v2078 = vld [vmem:[%s886 + $0x160] sm:$0xff]
        %v2079 = vld [vmem:[%s886 + $0x168] sm:$0xff]
        %v2080 = vld [vmem:[%s886 + $0x170] sm:$0xff]
        %v2081 = vld [vmem:[%s886 + $0x178] sm:$0xff]
        %v2082 = vld [vmem:[%s886 + $0x180] sm:$0xff]
        %v2083 = vld [vmem:[%s886 + $0x188] sm:$0xff]
        %v2084 = vld [vmem:[%s886 + $0x190] sm:$0xff]
        %v2085 = vld [vmem:[%s886 + $0x198] sm:$0xff]
        %v2086 = vld [vmem:[%s886 + $0x1a0] sm:$0xff]
        %v2087 = vld [vmem:[%s886 + $0x1a8] sm:$0xff]
        %v2088 = vld [vmem:[%s886 + $0x1b0] sm:$0xff]
        %v2089 = vld [vmem:[%s886 + $0x1b8] sm:$0xff]
        %v2090 = vld [vmem:[%s886 + $0x1c0] sm:$0xff]
        %v2091 = vld [vmem:[%s886 + $0x1c8] sm:$0xff]
        %v2092 = vld [vmem:[%s886 + $0x1d0] sm:$0xff]
        %v2093 = vld [vmem:[%s886 + $0x1d8] sm:$0xff]
        %v2094 = vld [vmem:[%s886 + $0x1e0] sm:$0xff]
        %v2095 = vld [vmem:[%s886 + $0x1e8] sm:$0xff]
        %v2096 = vld [vmem:[%s886 + $0x1f0] sm:$0xff]
        %v2097 = vld [vmem:[%s886 + $0x1f8] sm:$0xff]
        %2098 = vmatprep.subr.mxu0 %v2035
        %2099 = vmatpush1.msra.mxu0 %v2034
        %2100 = vmatprep.subr.mxu0 %v2039
        %2101 = vmatpush1.msra.mxu0 %v2038
        %2102 = vmatprep.subr.mxu0 %v2043
        %2103 = vmatpush1.msra.mxu0 %v2042
        %2104 = vmatprep.subr.mxu0 %v2047
        %2105 = vmatpush1.msra.mxu0 %v2046
        %2106 = vmatprep.subr.mxu0 %v2051
        %2107 = vmatpush1.msra.mxu0 %v2050
        %2108 = vmatprep.subr.mxu0 %v2055
        %2109 = vmatpush1.msra.mxu0 %v2054
        %2110 = vmatprep.subr.mxu0 %v2059
        %2111 = vmatpush1.msra.mxu0 %v2058
        %2112 = vmatprep.subr.mxu0 %v2063
        %2113 = vmatpush1.msra.mxu0 %v2062
        %2114 = vmatprep.subr.mxu0 %v2067
        %2115 = vmatpush1.msra.mxu0 %v2066
        %2116 = vmatprep.subr.mxu0 %v2071
        %2117 = vmatpush1.msra.mxu0 %v2070
        %2118 = vmatprep.subr.mxu0 %v2075
        %2119 = vmatpush1.msra.mxu0 %v2074
        %2120 = vmatprep.subr.mxu0 %v2079
        %2121 = vmatpush1.msra.mxu0 %v2078
        %2122 = vmatprep.subr.mxu0 %v2083
        %2123 = vmatpush1.msra.mxu0 %v2082
        %2124 = vmatprep.subr.mxu0 %v2087
        %2125 = vmatpush1.msra.mxu0 %v2086
        %2126 = vmatprep.subr.mxu0 %v2091
        %2127 = vmatpush1.msra.mxu0 %v2090
        %2128 = vmatprep.subr.mxu0 %v2095
        %2129 = vmatpush1.msra.mxu0 %v2094
        %2130 = vmatprep.subr.mxu0 0.0
        %2131 = vmatpush1.msra.mxu0 0.0
        %2132 = vmatprep.subr.mxu0 0.0
        %2133 = vmatpush1.msra.mxu0 0.0
        %2134 = vmatprep.subr.mxu0 0.0
        %2135 = vmatpush1.msra.mxu0 0.0
        %2136 = vmatprep.subr.mxu0 0.0
        %2137 = vmatpush1.msra.mxu0 0.0
        %2138 = vmatprep.subr.mxu0 0.0
        %2139 = vmatpush1.msra.mxu0 0.0
        %2140 = vmatprep.subr.mxu0 0.0
        %2141 = vmatpush1.msra.mxu0 0.0
        %2142 = vmatprep.subr.mxu0 0.0
        %2143 = vmatpush1.msra.mxu0 0.0
        %2144 = vmatprep.subr.mxu0 0.0
        %2145 = vmatpush1.msra.mxu0 0.0
        %2146 = vmatprep.subr.mxu0 0.0
        %2147 = vmatpush1.msra.mxu0 0.0
        %2148 = vmatprep.subr.mxu0 0.0
        %2149 = vmatpush1.msra.mxu0 0.0
        %2150 = vmatprep.subr.mxu0 0.0
        %2151 = vmatpush1.msra.mxu0 0.0
        %2152 = vmatprep.subr.mxu0 0.0
        %2153 = vmatpush1.msra.mxu0 0.0
        %2154 = vmatprep.subr.mxu0 0.0
        %2155 = vmatpush1.msra.mxu0 0.0
        %2156 = vmatprep.subr.mxu0 0.0
        %2157 = vmatpush1.msra.mxu0 0.0
        %2158 = vmatprep.subr.mxu0 0.0
        %2159 = vmatpush1.msra.mxu0 0.0
        %2160 = vmatprep.subr.mxu0 0.0
        %2161 = vmatpush1.msra.mxu0 0.0
        %2162 = vmatprep.mubr.f32.mxu0 0.0
        %2163 = vmatmul.mubr.f32.gmra.mrb[0].mxu0 %v2031
        %v2164 = vpop.f32.mrb[0].mxu0
        %v2165 = vadd.f32 0.0, %v2164
        %v2166 = vpop.f32.mrb[0].mxu0
        %v2167 = vadd.f32 0.0, %v2166
        %2168 = vdwg.mxu0
        %2169 = vmatprep.subr.mxu0 %v2037
        %2170 = vmatpush1.msra.mxu0 %v2036
        %2171 = vmatprep.subr.mxu0 %v2041
        %2172 = vmatpush1.msra.mxu0 %v2040
        %2173 = vmatprep.subr.mxu0 %v2045
        %2174 = vmatpush1.msra.mxu0 %v2044
        %2175 = vmatprep.subr.mxu0 %v2049
        %2176 = vmatpush1.msra.mxu0 %v2048
        %2177 = vmatprep.subr.mxu0 %v2053
        %2178 = vmatpush1.msra.mxu0 %v2052
        %2179 = vmatprep.subr.mxu0 %v2057
        %2180 = vmatpush1.msra.mxu0 %v2056
        %2181 = vmatprep.subr.mxu0 %v2061
        %2182 = vmatpush1.msra.mxu0 %v2060
        %2183 = vmatprep.subr.mxu0 %v2065
        %2184 = vmatpush1.msra.mxu0 %v2064
        %2185 = vmatprep.subr.mxu0 %v2069
        %2186 = vmatpush1.msra.mxu0 %v2068
        %2187 = vmatprep.subr.mxu0 %v2073
        %2188 = vmatpush1.msra.mxu0 %v2072
        %2189 = vmatprep.subr.mxu0 %v2077
        %2190 = vmatpush1.msra.mxu0 %v2076
        %2191 = vmatprep.subr.mxu0 %v2081
        %2192 = vmatpush1.msra.mxu0 %v2080
        %2193 = vmatprep.subr.mxu0 %v2085
        %2194 = vmatpush1.msra.mxu0 %v2084
        %2195 = vmatprep.subr.mxu0 %v2089
        %2196 = vmatpush1.msra.mxu0 %v2088
        %2197 = vmatprep.subr.mxu0 %v2093
        %2198 = vmatpush1.msra.mxu0 %v2092
        %2199 = vmatprep.subr.mxu0 %v2097
        %2200 = vmatpush1.msra.mxu0 %v2096
        %2201 = vmatprep.subr.mxu0 0.0
        %2202 = vmatpush1.msra.mxu0 0.0
        %2203 = vmatprep.subr.mxu0 0.0
        %2204 = vmatpush1.msra.mxu0 0.0
        %2205 = vmatprep.subr.mxu0 0.0
        %2206 = vmatpush1.msra.mxu0 0.0
        %2207 = vmatprep.subr.mxu0 0.0
        %2208 = vmatpush1.msra.mxu0 0.0
        %2209 = vmatprep.subr.mxu0 0.0
        %2210 = vmatpush1.msra.mxu0 0.0
        %2211 = vmatprep.subr.mxu0 0.0
        %2212 = vmatpush1.msra.mxu0 0.0
        %2213 = vmatprep.subr.mxu0 0.0
        %2214 = vmatpush1.msra.mxu0 0.0
        %2215 = vmatprep.subr.mxu0 0.0
        %2216 = vmatpush1.msra.mxu0 0.0
        %2217 = vmatprep.subr.mxu0 0.0
        %2218 = vmatpush1.msra.mxu0 0.0
        %2219 = vmatprep.subr.mxu0 0.0
        %2220 = vmatpush1.msra.mxu0 0.0
        %2221 = vmatprep.subr.mxu0 0.0
        %2222 = vmatpush1.msra.mxu0 0.0
        %2223 = vmatprep.subr.mxu0 0.0
        %2224 = vmatpush1.msra.mxu0 0.0
        %2225 = vmatprep.subr.mxu0 0.0
        %2226 = vmatpush1.msra.mxu0 0.0
        %2227 = vmatprep.subr.mxu0 0.0
        %2228 = vmatpush1.msra.mxu0 0.0
        %2229 = vmatprep.subr.mxu0 0.0
        %2230 = vmatpush1.msra.mxu0 0.0
        %2231 = vmatprep.subr.mxu0 0.0
        %2232 = vmatpush1.msra.mxu0 0.0
        %2233 = vmatprep.mubr.f32.mxu0 0.0
        %2234 = vmatmul.mubr.f32.gmra.mrb[0].mxu0 %v2031
        %v2235 = vpop.f32.mrb[0].mxu0
        %v2236 = vadd.f32 0.0, %v2235
        %v2237 = vpop.f32.mrb[0].mxu0
        %v2238 = vadd.f32 0.0, %v2237
        %2239 = vdwg.mxu0
        %v2240 = vadd.f32 %v1885, %v2165
        %v2241 = vadd.f32 %v1887, %v2167
        %v2242 = vadd.f32 %v1956, %v2236
        %v2243 = vadd.f32 %v1958, %v2238
        %v2244 = vld [vmem:[%s1097] sm:$0xff]
        %v2246 = vsel %vm245, %v2244, 0
        %2248 = vmatprep.subr.mxu0 0.0
        %2249 = vmatpush1.msra.mxu0 %v1402
        %2250 = vmatprep.subr.mxu0 0.0
        %2251 = vmatpush1.msra.mxu0 0.0
        %2252 = vmatprep.subr.mxu0 0.0
        %2253 = vmatpush1.msra.mxu0 0.0
        %2254 = vmatprep.subr.mxu0 0.0
        %2255 = vmatpush1.msra.mxu0 0.0
        %2256 = vmatprep.subr.mxu0 0.0
        %2257 = vmatpush1.msra.mxu0 0.0
        %2258 = vmatprep.subr.mxu0 0.0
        %2259 = vmatpush1.msra.mxu0 0.0
        %2260 = vmatprep.subr.mxu0 0.0
        %2261 = vmatpush1.msra.mxu0 0.0
        %2262 = vmatprep.subr.mxu0 0.0
        %2263 = vmatpush1.msra.mxu0 0.0
        %2264 = vmatprep.subr.mxu0 0.0
        %2265 = vmatpush1.msra.mxu0 0.0
        %2266 = vmatprep.subr.mxu0 0.0
        %2267 = vmatpush1.msra.mxu0 0.0
        %2268 = vmatprep.subr.mxu0 0.0
        %2269 = vmatpush1.msra.mxu0 0.0
        %2270 = vmatprep.subr.mxu0 0.0
        %2271 = vmatpush1.msra.mxu0 0.0
        %2272 = vmatprep.subr.mxu0 0.0
        %2273 = vmatpush1.msra.mxu0 0.0
        %2274 = vmatprep.subr.mxu0 0.0
        %2275 = vmatpush1.msra.mxu0 0.0
        %2276 = vmatprep.subr.mxu0 0.0
        %2277 = vmatpush1.msra.mxu0 0.0
        %2278 = vmatprep.subr.mxu0 0.0
        %2279 = vmatpush1.msra.mxu0 0.0
        %2280 = vmatprep.subr.mxu0 0.0
        %2281 = vmatpush1.msra.mxu0 0.0
        %2282 = vmatprep.subr.mxu0 0.0
        %2283 = vmatpush1.msra.mxu0 0.0
        %2284 = vmatprep.subr.mxu0 0.0
        %2285 = vmatpush1.msra.mxu0 0.0
        %2286 = vmatprep.subr.mxu0 0.0
        %2287 = vmatpush1.msra.mxu0 0.0
        %2288 = vmatprep.subr.mxu0 0.0
        %2289 = vmatpush1.msra.mxu0 0.0
        %2290 = vmatprep.subr.mxu0 0.0
        %2291 = vmatpush1.msra.mxu0 0.0
        %2292 = vmatprep.subr.mxu0 0.0
        %2293 = vmatpush1.msra.mxu0 0.0
        %2294 = vmatprep.subr.mxu0 0.0
        %2295 = vmatpush1.msra.mxu0 0.0
        %2296 = vmatprep.subr.mxu0 0.0
        %2297 = vmatpush1.msra.mxu0 0.0
        %2298 = vmatprep.subr.mxu0 0.0
        %2299 = vmatpush1.msra.mxu0 0.0
        %2300 = vmatprep.subr.mxu0 0.0
        %2301 = vmatpush1.msra.mxu0 0.0
        %2302 = vmatprep.subr.mxu0 0.0
        %2303 = vmatpush1.msra.mxu0 0.0
        %2304 = vmatprep.subr.mxu0 0.0
        %2305 = vmatpush1.msra.mxu0 0.0
        %2306 = vmatprep.subr.mxu0 0.0
        %2307 = vmatpush1.msra.mxu0 0.0
        %2308 = vmatprep.subr.mxu0 0.0
        %2309 = vmatpush1.msra.mxu0 0.0
        %2310 = vmatprep.subr.mxu0 0.0
        %2311 = vmatpush1.msra.mxu0 0.0
        %2312 = vmatprep.mubr.f32.mxu0 0.0
        %2313 = vmatmul.mubr.f32.gmra.mrb[0].mxu0 %v2246
        %v2314 = vpop.f32.mrb[0].mxu0
        %v2315 = vadd.f32 0.0, %v2314
        %v2316 = vpop.f32.mrb[0].mxu0
        %2317 = vdwg.mxu0
        %v2318 = vld [vmem:[%s1172] sm:$0xff]
        %v2319 = vld [vmem:[%s1172 + $0x8] sm:$0xff]
        %v2320 = vld [vmem:[%s1172 + $0x10] sm:$0xff]
        %v2321 = vld [vmem:[%s1172 + $0x18] sm:$0xff]
        %v2322 = vld [vmem:[%s1172 + $0x20] sm:$0xff]
        %v2323 = vld [vmem:[%s1172 + $0x28] sm:$0xff]
        %v2324 = vld [vmem:[%s1172 + $0x30] sm:$0xff]
        %v2325 = vld [vmem:[%s1172 + $0x38] sm:$0xff]
        %v2326 = vld [vmem:[%s1172 + $0x40] sm:$0xff]
        %v2327 = vld [vmem:[%s1172 + $0x48] sm:$0xff]
        %v2328 = vld [vmem:[%s1172 + $0x50] sm:$0xff]
        %v2329 = vld [vmem:[%s1172 + $0x58] sm:$0xff]
        %v2330 = vld [vmem:[%s1172 + $0x60] sm:$0xff]
        %v2331 = vld [vmem:[%s1172 + $0x68] sm:$0xff]
        %v2332 = vld [vmem:[%s1172 + $0x70] sm:$0xff]
        %v2333 = vld [vmem:[%s1172 + $0x78] sm:$0xff]
        %v2334 = vld [vmem:[%s1172 + $0x80] sm:$0xff]
        %v2335 = vld [vmem:[%s1172 + $0x88] sm:$0xff]
        %v2336 = vld [vmem:[%s1172 + $0x90] sm:$0xff]
        %v2337 = vld [vmem:[%s1172 + $0x98] sm:$0xff]
        %v2338 = vld [vmem:[%s1172 + $0xa0] sm:$0xff]
        %v2339 = vld [vmem:[%s1172 + $0xa8] sm:$0xff]
        %v2340 = vld [vmem:[%s1172 + $0xb0] sm:$0xff]
        %v2341 = vld [vmem:[%s1172 + $0xb8] sm:$0xff]
        %v2342 = vld [vmem:[%s1172 + $0xc0] sm:$0xff]
        %v2343 = vld [vmem:[%s1172 + $0xc8] sm:$0xff]
        %v2344 = vld [vmem:[%s1172 + $0xd0] sm:$0xff]
        %v2345 = vld [vmem:[%s1172 + $0xd8] sm:$0xff]
        %v2346 = vld [vmem:[%s1172 + $0xe0] sm:$0xff]
        %v2347 = vld [vmem:[%s1172 + $0xe8] sm:$0xff]
        %v2348 = vld [vmem:[%s1172 + $0xf0] sm:$0xff]
        %v2349 = vld [vmem:[%s1172 + $0xf8] sm:$0xff]
        %v2350 = vld [vmem:[%s1172 + $0x100] sm:$0xff]
        %v2351 = vld [vmem:[%s1172 + $0x108] sm:$0xff]
        %v2352 = vld [vmem:[%s1172 + $0x110] sm:$0xff]
        %v2353 = vld [vmem:[%s1172 + $0x118] sm:$0xff]
        %v2354 = vld [vmem:[%s1172 + $0x120] sm:$0xff]
        %v2355 = vld [vmem:[%s1172 + $0x128] sm:$0xff]
        %v2356 = vld [vmem:[%s1172 + $0x130] sm:$0xff]
        %v2357 = vld [vmem:[%s1172 + $0x138] sm:$0xff]
        %v2358 = vld [vmem:[%s1172 + $0x140] sm:$0xff]
        %v2359 = vld [vmem:[%s1172 + $0x148] sm:$0xff]
        %v2360 = vld [vmem:[%s1172 + $0x150] sm:$0xff]
        %v2361 = vld [vmem:[%s1172 + $0x158] sm:$0xff]
        %v2362 = vld [vmem:[%s1172 + $0x160] sm:$0xff]
        %v2363 = vld [vmem:[%s1172 + $0x168] sm:$0xff]
        %v2364 = vld [vmem:[%s1172 + $0x170] sm:$0xff]
        %v2365 = vld [vmem:[%s1172 + $0x178] sm:$0xff]
        %v2366 = vld [vmem:[%s1172 + $0x180] sm:$0xff]
        %v2367 = vld [vmem:[%s1172 + $0x188] sm:$0xff]
        %v2368 = vld [vmem:[%s1172 + $0x190] sm:$0xff]
        %v2369 = vld [vmem:[%s1172 + $0x198] sm:$0xff]
        %v2370 = vld [vmem:[%s1172 + $0x1a0] sm:$0xff]
        %v2371 = vld [vmem:[%s1172 + $0x1a8] sm:$0xff]
        %v2372 = vld [vmem:[%s1172 + $0x1b0] sm:$0xff]
        %v2373 = vld [vmem:[%s1172 + $0x1b8] sm:$0xff]
        %v2374 = vld [vmem:[%s1172 + $0x1c0] sm:$0xff]
        %v2375 = vld [vmem:[%s1172 + $0x1c8] sm:$0xff]
        %v2376 = vld [vmem:[%s1172 + $0x1d0] sm:$0xff]
        %v2377 = vld [vmem:[%s1172 + $0x1d8] sm:$0xff]
        %v2378 = vld [vmem:[%s1172 + $0x1e0] sm:$0xff]
        %v2379 = vld [vmem:[%s1172 + $0x1e8] sm:$0xff]
        %v2380 = vld [vmem:[%s1172 + $0x1f0] sm:$0xff]
        %v2381 = vld [vmem:[%s1172 + $0x1f8] sm:$0xff]
        %2382 = vmatprep.subr.mxu0 %v2319
        %2383 = vmatpush1.msra.mxu0 %v2318
        %2384 = vmatprep.subr.mxu0 %v2323
        %2385 = vmatpush1.msra.mxu0 %v2322
        %2386 = vmatprep.subr.mxu0 %v2327
        %2387 = vmatpush1.msra.mxu0 %v2326
        %2388 = vmatprep.subr.mxu0 %v2331
        %2389 = vmatpush1.msra.mxu0 %v2330
        %2390 = vmatprep.subr.mxu0 %v2335
        %2391 = vmatpush1.msra.mxu0 %v2334
        %2392 = vmatprep.subr.mxu0 %v2339
        %2393 = vmatpush1.msra.mxu0 %v2338
        %2394 = vmatprep.subr.mxu0 %v2343
        %2395 = vmatpush1.msra.mxu0 %v2342
        %2396 = vmatprep.subr.mxu0 %v2347
        %2397 = vmatpush1.msra.mxu0 %v2346
        %2398 = vmatprep.subr.mxu0 %v2351
        %2399 = vmatpush1.msra.mxu0 %v2350
        %2400 = vmatprep.subr.mxu0 %v2355
        %2401 = vmatpush1.msra.mxu0 %v2354
        %2402 = vmatprep.subr.mxu0 %v2359
        %2403 = vmatpush1.msra.mxu0 %v2358
        %2404 = vmatprep.subr.mxu0 %v2363
        %2405 = vmatpush1.msra.mxu0 %v2362
        %2406 = vmatprep.subr.mxu0 %v2367
        %2407 = vmatpush1.msra.mxu0 %v2366
        %2408 = vmatprep.subr.mxu0 %v2371
        %2409 = vmatpush1.msra.mxu0 %v2370
        %2410 = vmatprep.subr.mxu0 %v2375
        %2411 = vmatpush1.msra.mxu0 %v2374
        %2412 = vmatprep.subr.mxu0 %v2379
        %2413 = vmatpush1.msra.mxu0 %v2378
        %2414 = vmatprep.subr.mxu0 0.0
        %2415 = vmatpush1.msra.mxu0 0.0
        %2416 = vmatprep.subr.mxu0 0.0
        %2417 = vmatpush1.msra.mxu0 0.0
        %2418 = vmatprep.subr.mxu0 0.0
        %2419 = vmatpush1.msra.mxu0 0.0
        %2420 = vmatprep.subr.mxu0 0.0
        %2421 = vmatpush1.msra.mxu0 0.0
        %2422 = vmatprep.subr.mxu0 0.0
        %2423 = vmatpush1.msra.mxu0 0.0
        %2424 = vmatprep.subr.mxu0 0.0
        %2425 = vmatpush1.msra.mxu0 0.0
        %2426 = vmatprep.subr.mxu0 0.0
        %2427 = vmatpush1.msra.mxu0 0.0
        %2428 = vmatprep.subr.mxu0 0.0
        %2429 = vmatpush1.msra.mxu0 0.0
        %2430 = vmatprep.subr.mxu0 0.0
        %2431 = vmatpush1.msra.mxu0 0.0
        %2432 = vmatprep.subr.mxu0 0.0
        %2433 = vmatpush1.msra.mxu0 0.0
        %2434 = vmatprep.subr.mxu0 0.0
        %2435 = vmatpush1.msra.mxu0 0.0
        %2436 = vmatprep.subr.mxu0 0.0
        %2437 = vmatpush1.msra.mxu0 0.0
        %2438 = vmatprep.subr.mxu0 0.0
        %2439 = vmatpush1.msra.mxu0 0.0
        %2440 = vmatprep.subr.mxu0 0.0
        %2441 = vmatpush1.msra.mxu0 0.0
        %2442 = vmatprep.subr.mxu0 0.0
        %2443 = vmatpush1.msra.mxu0 0.0
        %2444 = vmatprep.subr.mxu0 0.0
        %2445 = vmatpush1.msra.mxu0 0.0
        %2446 = vmatprep.mubr.f32.mxu0 0.0
        %2447 = vmatmul.mubr.f32.gmra.mrb[0].mxu0 %v2315
        %v2448 = vpop.f32.mrb[0].mxu0
        %v2449 = vadd.f32 0.0, %v2448
        %v2450 = vpop.f32.mrb[0].mxu0
        %v2451 = vadd.f32 0.0, %v2450
        %2452 = vdwg.mxu0
        %2453 = vmatprep.subr.mxu0 %v2321
        %2454 = vmatpush1.msra.mxu0 %v2320
        %2455 = vmatprep.subr.mxu0 %v2325
        %2456 = vmatpush1.msra.mxu0 %v2324
        %2457 = vmatprep.subr.mxu0 %v2329
        %2458 = vmatpush1.msra.mxu0 %v2328
        %2459 = vmatprep.subr.mxu0 %v2333
        %2460 = vmatpush1.msra.mxu0 %v2332
        %2461 = vmatprep.subr.mxu0 %v2337
        %2462 = vmatpush1.msra.mxu0 %v2336
        %2463 = vmatprep.subr.mxu0 %v2341
        %2464 = vmatpush1.msra.mxu0 %v2340
        %2465 = vmatprep.subr.mxu0 %v2345
        %2466 = vmatpush1.msra.mxu0 %v2344
        %2467 = vmatprep.subr.mxu0 %v2349
        %2468 = vmatpush1.msra.mxu0 %v2348
        %2469 = vmatprep.subr.mxu0 %v2353
        %2470 = vmatpush1.msra.mxu0 %v2352
        %2471 = vmatprep.subr.mxu0 %v2357
        %2472 = vmatpush1.msra.mxu0 %v2356
        %2473 = vmatprep.subr.mxu0 %v2361
        %2474 = vmatpush1.msra.mxu0 %v2360
        %2475 = vmatprep.subr.mxu0 %v2365
        %2476 = vmatpush1.msra.mxu0 %v2364
        %2477 = vmatprep.subr.mxu0 %v2369
        %2478 = vmatpush1.msra.mxu0 %v2368
        %2479 = vmatprep.subr.mxu0 %v2373
        %2480 = vmatpush1.msra.mxu0 %v2372
        %2481 = vmatprep.subr.mxu0 %v2377
        %2482 = vmatpush1.msra.mxu0 %v2376
        %2483 = vmatprep.subr.mxu0 %v2381
        %2484 = vmatpush1.msra.mxu0 %v2380
        %2485 = vmatprep.subr.mxu0 0.0
        %2486 = vmatpush1.msra.mxu0 0.0
        %2487 = vmatprep.subr.mxu0 0.0
        %2488 = vmatpush1.msra.mxu0 0.0
        %2489 = vmatprep.subr.mxu0 0.0
        %2490 = vmatpush1.msra.mxu0 0.0
        %2491 = vmatprep.subr.mxu0 0.0
        %2492 = vmatpush1.msra.mxu0 0.0
        %2493 = vmatprep.subr.mxu0 0.0
        %2494 = vmatpush1.msra.mxu0 0.0
        %2495 = vmatprep.subr.mxu0 0.0
        %2496 = vmatpush1.msra.mxu0 0.0
        %2497 = vmatprep.subr.mxu0 0.0
        %2498 = vmatpush1.msra.mxu0 0.0
        %2499 = vmatprep.subr.mxu0 0.0
        %2500 = vmatpush1.msra.mxu0 0.0
        %2501 = vmatprep.subr.mxu0 0.0
        %2502 = vmatpush1.msra.mxu0 0.0
        %2503 = vmatprep.subr.mxu0 0.0
        %2504 = vmatpush1.msra.mxu0 0.0
        %2505 = vmatprep.subr.mxu0 0.0
        %2506 = vmatpush1.msra.mxu0 0.0
        %2507 = vmatprep.subr.mxu0 0.0
        %2508 = vmatpush1.msra.mxu0 0.0
        %2509 = vmatprep.subr.mxu0 0.0
        %2510 = vmatpush1.msra.mxu0 0.0
        %2511 = vmatprep.subr.mxu0 0.0
        %2512 = vmatpush1.msra.mxu0 0.0
        %2513 = vmatprep.subr.mxu0 0.0
        %2514 = vmatpush1.msra.mxu0 0.0
        %2515 = vmatprep.subr.mxu0 0.0
        %2516 = vmatpush1.msra.mxu0 0.0
        %2517 = vmatprep.mubr.f32.mxu0 0.0
        %2518 = vmatmul.mubr.f32.gmra.mrb[0].mxu0 %v2315
        %v2519 = vpop.f32.mrb[0].mxu0
        %v2520 = vadd.f32 0.0, %v2519
        %v2521 = vpop.f32.mrb[0].mxu0
        %v2522 = vadd.f32 0.0, %v2521
        %2523 = vdwg.mxu0
        %v2524 = vadd.f32 %v2240, %v2449
        %v2525 = vadd.f32 %v2241, %v2451
        %v2526 = vadd.f32 %v2242, %v2520
        %v2527 = vadd.f32 %v2243, %v2522
        %v2528 = vadd.f32 %v2524, %v1386
        %v2529 = vadd.f32 %v2525, %v1386
        %v2530 = vadd.f32 %v2526, %v1386
        %v2531 = vadd.f32 %v2527, %v1386
        %2532 = vst [vmem:[%s230 + $0x20] sm:$0xff] %v2528
        %2533 = vst [vmem:[%s230 + $0x28] sm:$0xff] %v2529
        %2534 = vst [vmem:[%s230 + $0x30] sm:$0xff] %v2530
        %2535 = vst [vmem:[%s230 + $0x38] sm:$0xff] %v2531
        %s2536 = sand.u32 %s132, 1
        %s2537 = scalar_lea.sflag [#allocation4], %s2536
        %s2538 = sand.u32 %s132, 1
        %s2539 = smul.addr %s2538, 64
        %s2540 = scalar_lea.vmem [#allocation5], %s2539
        // Predicated region
        $region41: #{tpu_custom_call.1} parent=35 // pred_check
          %p2541 = pneg %p142
        $region42: #{tpu_custom_call.1} parent=35 // pred_check_branch
          %2543 = sbr.rel (%p2541) target = $region44
        $region43: #{tpu_custom_call.1} parent=35 // pred_region
          %s2544 = smul.u32 8, %s24
          %s2546 = ssub.s32 1024, 1024
          %2547 = vsyncadd %s2537, %s2546
          %s2548 = smul.addr %s23, 8
          %s2549 = sadd.s32 %s2544, %s2548
          %s2550 = smul.addr %s2549, 128
          %s2551 = scalar_lea.hbm %s4, %s2550
          %s2553 = sshll.u32 %s2540, 4
          %s2554 = int_to_ptr.vmem [resolvable:$true] %s2553
          %2556 = dma.vmem_to_hbm [thread:$0]  %s2554, 1024, %s2551, %s2537
        $region44: #{tpu_custom_call.1} parent=35 // pred_fallthru
          _
      $region36: #{tpu_custom_call.1} parent=5 // pred_fallthru
        _
      %p2557 = scmp.le.s32.totalorder 2, %s14
      // Predicated region
      $region45: #{tpu_custom_call.1} parent=5 // pred_check
        %p2558 = pneg %p2557
      $region46: #{tpu_custom_call.1} parent=5 // pred_check_branch
        %2560 = sbr.rel (%p2558) target = $region48
      $region47: #{tpu_custom_call.1} parent=5 // pred_region
        %s2561 = ssub.s32 %s14, 2
        // Predicated region
        $region49: #{tpu_custom_call.1} parent=47 // pred_check
          %p2562 = pneg %p148
        $region50: #{tpu_custom_call.1} parent=47 // pred_check_branch
          %2564 = sbr.rel (%p2562) target = $region52
        $region51: #{tpu_custom_call.1} parent=47 // pred_region
          %s2565 = sand.u32 %s133, 1
          %s2566 = scalar_lea.sflag [#allocation4], %s2565
          %s2567 = sand.u32 %s133, 1
          %s2568 = smul.addr %s2567, 64
          %s2569 = scalar_lea.vmem [#allocation5], %s2568
          %2570 = dma.done %s2566, 1024
        $region52: #{tpu_custom_call.1} parent=47 // pred_fallthru
          _
      $region48: #{tpu_custom_call.1} parent=5 // pred_fallthru
        _
    $region6: #{tpu_custom_call.1} parent=1 // loop_footer
      %s18 = sadd.s32 1, %s14
    $region7: #{tpu_custom_call.1} parent=1 // loop_footer_branch
      %13 = sbr.rel target = $region3
    $region8: #{tpu_custom_call.1} parent=1 // loop_exit
      _
    %2571 = vsyncpa [#allocation3], 1
    %s2572 = scalar_lea.sflag [#allocation3], 1
    %2573 = vsyncpa %s2572, 1
    %2574 = vsyncpa [#allocation4], 1
    %s2575 = scalar_lea.sflag [#allocation4], 1
    %2576 = vsyncpa %s2575, 1

</llo_original>
